<compile_context>
chip_gen: v6e
topology: v6e:2x2x1
jax: 0.10.0
libtpu: 0.0.40
codegen_flags: <defaults>
</compile_context>

<pallas_src>
import functools

import jax
import jax.numpy as jnp
from jax.experimental import pallas as pl
from jax.experimental.pallas import tpu as pltpu

EPS = 1e-5
# Above the default scoped limits (16/32/32 MiB) yet within physical VMEM on
# every generation (v7x has 64 MiB / TC).
VMEM_LIMIT = 64 * 1024 * 1024


def _ln(x, g, b):
    # f32 LayerNorm, eps matches CLIP / nn.LayerNorm default.
    mu = jnp.mean(x, axis=-1, keepdims=True)
    var = jnp.mean((x - mu) ** 2, axis=-1, keepdims=True)
    return (x - mu) * jax.lax.rsqrt(var + EPS) * g + b


# ------------------------------ Pallas kernel ------------------------------ #

def vit_kernel(heads,
               xp_ref, wpe_ref, pos_ref, gpre_ref, bpre_ref,
               wqkv_ref, bqkv_ref, wo_ref, bo_ref,
               g1_ref, b1_ref, g2_ref, b2_ref,
               f1w_ref, f1b_ref, f2w_ref, f2b_ref,
               gpost_ref, bpost_ref, proj_ref,
               out_ref, tok_ref):
    l = pl.program_id(1)

    # ---- l == 0: patch embed (conv1 as matmul) + class/pos embed + ln_pre ----
    @pl.when(l == 0)
    def _():
        # xp row 0 is all zeros; the class embedding is pre-folded into pos[0].
        emb = jnp.dot(xp_ref[0].astype(jnp.bfloat16), wpe_ref[...],
                      preferred_element_type=jnp.float32)              # (S, W) f32
        tok_ref[...] = _ln(emb + pos_ref[...], gpre_ref[...], bpre_ref[...])

    x = tok_ref[...]                                  # (S, W) f32, VMEM-resident
    S, W = x.shape
    hd = W // heads

    # ---------------- multi-head self-attention (pre-LN) ---------------- #
    h = _ln(x, g1_ref[0], b1_ref[0]).astype(jnp.bfloat16)
    # fused QKV projection: one (S,W) @ (W,3W) matmul (attention scale is
    # pre-folded into the q columns / bias on the host).
    qkv = (jnp.dot(h, wqkv_ref[0], preferred_element_type=jnp.float32)
           + bqkv_ref[0]).astype(jnp.bfloat16)        # (S, 3W)

    head_outs = []
    for i in range(heads):                            # static unroll; QKV already fused
        q_h = qkv[:, i * hd:(i + 1) * hd]
        k_h = qkv[:, W + i * hd:W + (i + 1) * hd]
        v_h = qkv[:, 2 * W + i * hd:2 * W + (i + 1) * hd]
        # scores without an explicit transpose: contract last dims of q and k.
        s = jax.lax.dot_general(q_h, k_h, (((1,), (1,)), ((), ())),
                                preferred_element_type=jnp.float32)    # (S, S) f32
        s = s - jnp.max(s, axis=-1, keepdims=True)
        p = jnp.exp(s)
        p = p * pl.reciprocal(jnp.sum(p, axis=-1, keepdims=True), approx=True)
        head_outs.append(jnp.dot(p.astype(jnp.bfloat16), v_h,
                                 preferred_element_type=jnp.float32))  # (S, hd)

    # fused output projection: concat heads then one (S,W) @ (W,W) matmul.
    attn = jnp.concatenate(head_outs, axis=1).astype(jnp.bfloat16)     # (S, W)
    x = x + jnp.dot(attn, wo_ref[0], preferred_element_type=jnp.float32) + bo_ref[0]

    # ------------------------------- MLP -------------------------------- #
    h2 = _ln(x, g2_ref[0], b2_ref[0]).astype(jnp.bfloat16)
    m = jnp.dot(h2, f1w_ref[0], preferred_element_type=jnp.float32) + f1b_ref[0]
    m = m * jax.nn.sigmoid(1.702 * m)                 # QuickGELU (f32)
    x = x + jnp.dot(m.astype(jnp.bfloat16), f2w_ref[0],
                    preferred_element_type=jnp.float32) + f2b_ref[0]

    tok_ref[...] = x

    # ---- l == L-1: ln_post on the class token + projection (head) ---------- #
    @pl.when(l == pl.num_programs(1) - 1)
    def _():
        cls_tok = _ln(x[0:1, :], gpost_ref[...], bpost_ref[...]).astype(jnp.bfloat16)
        out_ref[0] = jnp.dot(cls_tok, proj_ref[...],
                             preferred_element_type=jnp.float32)       # (1, D)


# ------------------------------- parameters -------------------------------- #

def init_params(key, *, width, layers, heads, patch_size, num_patches, output_dim):
    ph, pw = patch_size
    scale = width ** -0.5
    S = num_patches + 1
    hd = width // heads
    ks = jax.random.split(key, 4 + layers)
    params = {
        "conv_w": 0.02 * jax.random.normal(ks[0], (width, 3, ph, pw), jnp.float32),
        "cls": scale * jax.random.normal(ks[1], (width,), jnp.float32),
        "pos": scale * jax.random.normal(ks[2], (S, width), jnp.float32),
        "ln_pre_g": jnp.ones((1, width), jnp.float32),
        "ln_pre_b": jnp.zeros((1, width), jnp.float32),
        "ln_post_g": jnp.ones((1, width), jnp.float32),
        "ln_post_b": jnp.zeros((1, width), jnp.float32),
        "proj": scale * jax.random.normal(ks[3], (width, output_dim), jnp.float32),
        "blocks": [],
    }
    for l in range(layers):
        bk = jax.random.split(ks[4 + l], 6)
        params["blocks"].append({
            "g1": jnp.ones((1, width), jnp.float32), "b1": jnp.zeros((1, width), jnp.float32),
            "wq": 0.02 * jax.random.normal(bk[0], (heads, width, hd), jnp.float32),
            "bq": jnp.zeros((heads, 1, hd), jnp.float32),
            "wk": 0.02 * jax.random.normal(bk[1], (heads, width, hd), jnp.float32),
            "bk": jnp.zeros((heads, 1, hd), jnp.float32),
            "wv": 0.02 * jax.random.normal(bk[2], (heads, width, hd), jnp.float32),
            "bv": jnp.zeros((heads, 1, hd), jnp.float32),
            "wo": 0.02 * jax.random.normal(bk[3], (heads, hd, width), jnp.float32),
            "bo": jnp.zeros((1, width), jnp.float32),
            "g2": jnp.ones((1, width), jnp.float32), "b2": jnp.zeros((1, width), jnp.float32),
            "f1w": 0.02 * jax.random.normal(bk[4], (width, 4 * width), jnp.float32),
            "f1b": jnp.zeros((1, 4 * width), jnp.float32),
            "f2w": 0.02 * jax.random.normal(bk[5], (4 * width, width), jnp.float32),
            "f2b": jnp.zeros((1, width), jnp.float32),
        })
    return params


def pack_params(params, *, heads):
    # One-time host transform: fuse per-head QKV / output-projection weights,
    # fold the attention scale into wq/bq, fold the class embedding into row 0
    # of the positional embedding, stack per-layer weights along a leading
    # [layers] axis, and cast matmul weights to bfloat16.
    width = params["conv_w"].shape[0]
    P = int(params["conv_w"].size) // width
    hd = width // heads
    scale = hd ** -0.5
    bf16 = jnp.bfloat16

    def merge_w(w):   # (heads, width, hd) -> (width, heads*hd)
        return jnp.transpose(w, (1, 0, 2)).reshape(width, width)

    def merge_b(b):   # (heads, 1, hd) -> (1, heads*hd)
        return jnp.transpose(b, (1, 0, 2)).reshape(1, width)

    wqkv, bqkv, wo, bo = [], [], [], []
    g1, b1, g2, b2 = [], [], [], []
    f1w, f1b, f2w, f2b = [], [], [], []
    for blk in params["blocks"]:
        wqkv.append(jnp.concatenate(
            [merge_w(blk["wq"]) * scale, merge_w(blk["wk"]), merge_w(blk["wv"])], axis=1))
        bqkv.append(jnp.concatenate(
            [merge_b(blk["bq"]) * scale, merge_b(blk["bk"]), merge_b(blk["bv"])], axis=1))
        wo.append(blk["wo"].reshape(width, width))   # rows ordered (head, hd) = concat order
        bo.append(blk["bo"])
        g1.append(blk["g1"]); b1.append(blk["b1"])
        g2.append(blk["g2"]); b2.append(blk["b2"])
        f1w.append(blk["f1w"]); f1b.append(blk["f1b"])
        f2w.append(blk["f2w"]); f2b.append(blk["f2b"])

    # class embedding folded into pos[0] (the kernel sees a zero patch row 0).
    pos_cls = params["pos"].at[0, :].add(params["cls"])

    return {
        "w_pe": params["conv_w"].reshape(width, P).T.astype(bf16),   # (P, W)
        "pos": pos_cls,                                              # (S, W) f32
        "ln_pre_g": params["ln_pre_g"], "ln_pre_b": params["ln_pre_b"],
        "ln_post_g": params["ln_post_g"], "ln_post_b": params["ln_post_b"],
        "proj": params["proj"].astype(bf16),
        "wqkv": jnp.stack(wqkv).astype(bf16),    # (L, W, 3W)
        "bqkv": jnp.stack(bqkv),                 # (L, 1, 3W) f32
        "wo": jnp.stack(wo).astype(bf16),        # (L, W, W)
        "bo": jnp.stack(bo),                     # (L, 1, W)
        "g1": jnp.stack(g1), "b1": jnp.stack(b1),
        "g2": jnp.stack(g2), "b2": jnp.stack(b2),
        "f1w": jnp.stack(f1w).astype(bf16),      # (L, W, 4W)
        "f1b": jnp.stack(f1b),                   # (L, 1, 4W)
        "f2w": jnp.stack(f2w).astype(bf16),      # (L, 4W, W)
        "f2b": jnp.stack(f2b),                   # (L, 1, W)
    }


# ------------------------------ wrapper / glue ------------------------------ #

def vit_forward(x, pk, *, patch_size, heads):
    B, C, H, Wimg = x.shape
    ph, pw = patch_size
    nh, nw = H // ph, Wimg // pw
    N = nh * nw
    P = C * ph * pw
    width = pk["pos"].shape[1]
    S = N + 1
    D = pk["proj"].shape[1]
    L = pk["wqkv"].shape[0]
    W3, W4 = 3 * width, 4 * width

    # glue: unfold NCHW into patch rows [B, N, C*ph*pw]; conv1 becomes a matmul.
    # Prepend an all-zero row for the class-token slot (its embedding is
    # pre-folded into pos[0]).
    xp = x.reshape(B, C, nh, ph, nw, pw).transpose(0, 2, 4, 1, 3, 5).reshape(B, N, P)
    xp = jnp.concatenate([jnp.zeros((B, 1, P), xp.dtype), xp], axis=1)   # (B, S, P)

    def fixed(shape):
        return pl.BlockSpec(shape, lambda b, l: (0,) * len(shape))

    def per_layer(shape):
        return pl.BlockSpec((1,) + shape, lambda b, l: (l,) + (0,) * len(shape))

    out = pl.pallas_call(
        functools.partial(vit_kernel, heads),
        out_shape=jax.ShapeDtypeStruct((B, 1, D), jnp.float32),
        grid_spec=pltpu.PrefetchScalarGridSpec(
            num_scalar_prefetch=0, grid=(B, L),
            in_specs=[pl.BlockSpec((1, S, P), lambda b, l: (b, 0, 0)),   # patches
                      fixed((P, width)), fixed((S, width)),              # w_pe, pos
                      fixed((1, width)), fixed((1, width)),              # ln_pre g,b
                      per_layer((width, W3)), per_layer((1, W3)),        # wqkv, bqkv
                      per_layer((width, width)), per_layer((1, width)),  # wo, bo
                      per_layer((1, width)), per_layer((1, width)),      # g1, b1
                      per_layer((1, width)), per_layer((1, width)),      # g2, b2
                      per_layer((width, W4)), per_layer((1, W4)),        # f1w, f1b
                      per_layer((W4, width)), per_layer((1, width)),     # f2w, f2b
                      fixed((1, width)), fixed((1, width)),              # ln_post g,b
                      fixed((width, D))],                                # proj
            out_specs=pl.BlockSpec((1, 1, D), lambda b, l: (b, 0, 0)),
            scratch_shapes=[pltpu.VMEM((S, width), jnp.float32)]),        # token state
        compiler_params=pltpu.CompilerParams(
            dimension_semantics=("parallel", "arbitrary"),
            vmem_limit_bytes=VMEM_LIMIT),
    )(xp, pk["w_pe"], pk["pos"], pk["ln_pre_g"], pk["ln_pre_b"],
      pk["wqkv"], pk["bqkv"], pk["wo"], pk["bo"],
      pk["g1"], pk["b1"], pk["g2"], pk["b2"],
      pk["f1w"], pk["f1b"], pk["f2w"], pk["f2b"],
      pk["ln_post_g"], pk["ln_post_b"], pk["proj"])
    return out.reshape(B, D)


if __name__ == "__main__":
    input_resolution = (16, 16)
    patch_size = (8, 8)
    width, layers, heads, output_dim = 32, 2, 4, 16
    B = 2

    key = jax.random.PRNGKey(0)
    kx, kp = jax.random.split(key)
    x = jax.random.normal(kx, (B, 3, *input_resolution), jnp.float32)

    nh = input_resolution[0] // patch_size[0]
    nw = input_resolution[1] // patch_size[1]
    params = init_params(kp, width=width, layers=layers, heads=heads,
                         patch_size=patch_size, num_patches=nh * nw,
                         output_dim=output_dim)
    packed = pack_params(params, heads=heads)   # one-time host-side weight prep

    out = vit_forward(x, packed, patch_size=patch_size, heads=heads)
    out = jax.block_until_ready(out)
    assert out.shape == (B, output_dim) and out.dtype == jnp.float32
    assert bool(jnp.all(jnp.isfinite(out)))
    print("KERNEL_OK")
</pallas_src>

<mosaic_0001>
module attributes {stable_mosaic.version = 11 : i64} {
  func.func @vit_kernel(%arg0: i32, %arg1: i32, %arg2: memref<1x5x192xf32, #tpu.memory_space<vmem>>, %arg3: memref<192x32xbf16, #tpu.memory_space<vmem>>, %arg4: memref<5x32xf32, #tpu.memory_space<vmem>>, %arg5: memref<1x32xf32, #tpu.memory_space<vmem>>, %arg6: memref<1x32xf32, #tpu.memory_space<vmem>>, %arg7: memref<1x32x96xbf16, #tpu.memory_space<vmem>>, %arg8: memref<1x1x96xf32, #tpu.memory_space<vmem>>, %arg9: memref<1x32x32xbf16, #tpu.memory_space<vmem>>, %arg10: memref<1x1x32xf32, #tpu.memory_space<vmem>>, %arg11: memref<1x1x32xf32, #tpu.memory_space<vmem>>, %arg12: memref<1x1x32xf32, #tpu.memory_space<vmem>>, %arg13: memref<1x1x32xf32, #tpu.memory_space<vmem>>, %arg14: memref<1x1x32xf32, #tpu.memory_space<vmem>>, %arg15: memref<1x32x128xbf16, #tpu.memory_space<vmem>>, %arg16: memref<1x1x128xf32, #tpu.memory_space<vmem>>, %arg17: memref<1x128x32xbf16, #tpu.memory_space<vmem>>, %arg18: memref<1x1x32xf32, #tpu.memory_space<vmem>>, %arg19: memref<1x32xf32, #tpu.memory_space<vmem>>, %arg20: memref<1x32xf32, #tpu.memory_space<vmem>>, %arg21: memref<32x16xbf16, #tpu.memory_space<vmem>>, %arg22: memref<1x1x16xf32, #tpu.memory_space<vmem>>, %arg23: memref<5x32xf32, #tpu.memory_space<vmem>>) attributes {dimension_semantics = [#tpu.dimension_semantics<parallel>, #tpu.dimension_semantics<arbitrary>], iteration_bounds = array<i64: 2, 2>, scalar_prefetch = 0 : i64, scratch_operands = 1 : i64, tpu.core_type = #tpu.core_type<tc>, window_params = [{transform_indices = @transform_0, window_bounds = array<i64: 1, 5, 192>}, {pipeline_mode = #tpu.pipeline_mode<synchronous>, transform_indices = @transform_1, window_bounds = array<i64: 192, 32>}, {pipeline_mode = #tpu.pipeline_mode<synchronous>, transform_indices = @transform_2, window_bounds = array<i64: 5, 32>}, {pipeline_mode = #tpu.pipeline_mode<synchronous>, transform_indices = @transform_3, window_bounds = array<i64: 1, 32>}, {pipeline_mode = #tpu.pipeline_mode<synchronous>, transform_indices = @transform_4, window_bounds = array<i64: 1, 32>}, {transform_indices = @transform_5, window_bounds = array<i64: 1, 32, 96>}, {transform_indices = @transform_6, window_bounds = array<i64: 1, 1, 96>}, {transform_indices = @transform_7, window_bounds = array<i64: 1, 32, 32>}, {transform_indices = @transform_8, window_bounds = array<i64: 1, 1, 32>}, {transform_indices = @transform_9, window_bounds = array<i64: 1, 1, 32>}, {transform_indices = @transform_10, window_bounds = array<i64: 1, 1, 32>}, {transform_indices = @transform_11, window_bounds = array<i64: 1, 1, 32>}, {transform_indices = @transform_12, window_bounds = array<i64: 1, 1, 32>}, {transform_indices = @transform_13, window_bounds = array<i64: 1, 32, 128>}, {transform_indices = @transform_14, window_bounds = array<i64: 1, 1, 128>}, {transform_indices = @transform_15, window_bounds = array<i64: 1, 128, 32>}, {transform_indices = @transform_16, window_bounds = array<i64: 1, 1, 32>}, {pipeline_mode = #tpu.pipeline_mode<synchronous>, transform_indices = @transform_17, window_bounds = array<i64: 1, 32>}, {pipeline_mode = #tpu.pipeline_mode<synchronous>, transform_indices = @transform_18, window_bounds = array<i64: 1, 32>}, {pipeline_mode = #tpu.pipeline_mode<synchronous>, transform_indices = @transform_19, window_bounds = array<i64: 32, 16>}, {transform_indices = @transform_20, window_bounds = array<i64: 1, 1, 16>}]} {
    %c0_i32 = arith.constant 0 : i32
    %0 = arith.cmpi eq, %arg1, %c0_i32 : i32
    %1 = arith.extui %0 : i1 to i32
    %c0_i32_0 = arith.constant 0 : i32
    %2 = arith.cmpi ne, %1, %c0_i32_0 : i32
    scf.if %2 {
      %c0_72 = arith.constant 0 : index
      %c0_73 = arith.constant 0 : index
      %c0_74 = arith.constant 0 : index
      %168 = vector.load %arg2[%c0_72, %c0_73, %c0_74] : memref<1x5x192xf32, #tpu.memory_space<vmem>>, vector<1x5x192xf32>
      %169 = vector.shape_cast %168 : vector<1x5x192xf32> to vector<5x192xf32>
      %170 = arith.truncf %169 : vector<5x192xf32> to vector<5x192xbf16>
      %c0_75 = arith.constant 0 : index
      %c0_76 = arith.constant 0 : index
      %171 = vector.load %arg3[%c0_75, %c0_76] : memref<192x32xbf16, #tpu.memory_space<vmem>>, vector<192x32xbf16>
      %cst_77 = arith.constant dense<0.000000e+00> : vector<5x32xf32>
      %172 = tpu.matmul %170, %171, %cst_77 {dimension_numbers = #tpu.dot_dimension_numbers<[1], [0], [0], [1], [0, 0, 1, 1], [], []>} : vector<5x192xbf16>, vector<192x32xbf16>, vector<5x32xf32> -> vector<5x32xf32>
      %c0_78 = arith.constant 0 : index
      %c0_79 = arith.constant 0 : index
      %173 = vector.load %arg4[%c0_78, %c0_79] : memref<5x32xf32, #tpu.memory_space<vmem>>, vector<5x32xf32>
      %174 = arith.addf %172, %173 : vector<5x32xf32>
      %c0_80 = arith.constant 0 : index
      %c0_81 = arith.constant 0 : index
      %175 = vector.load %arg5[%c0_80, %c0_81] : memref<1x32xf32, #tpu.memory_space<vmem>>, vector<1x32xf32>
      %c0_82 = arith.constant 0 : index
      %c0_83 = arith.constant 0 : index
      %176 = vector.load %arg6[%c0_82, %c0_83] : memref<1x32xf32, #tpu.memory_space<vmem>>, vector<1x32xf32>
      %cst_84 = arith.constant dense<0.000000e+00> : vector<5xf32>
      %177 = vector.multi_reduction <add>, %174, %cst_84 [1] : vector<5x32xf32> to vector<5xf32>
      %178 = vector.shape_cast %177 : vector<5xf32> to vector<5x1xf32>
      %cst_85 = arith.constant 3.200000e+01 : f32
      %179 = vector.broadcast %cst_85 : f32 to vector<5x1xf32>
      %180 = arith.divf %178, %179 : vector<5x1xf32>
      %181 = vector.broadcast %180 : vector<5x1xf32> to vector<5x32xf32>
      %182 = arith.subf %174, %181 : vector<5x32xf32>
      %183 = arith.mulf %182, %182 : vector<5x32xf32>
      %cst_86 = arith.constant dense<0.000000e+00> : vector<5xf32>
      %184 = vector.multi_reduction <add>, %183, %cst_86 [1] : vector<5x32xf32> to vector<5xf32>
      %185 = vector.shape_cast %184 : vector<5xf32> to vector<5x1xf32>
      %cst_87 = arith.constant 3.200000e+01 : f32
      %186 = vector.broadcast %cst_87 : f32 to vector<5x1xf32>
      %187 = arith.divf %185, %186 : vector<5x1xf32>
      %188 = vector.broadcast %180 : vector<5x1xf32> to vector<5x32xf32>
      %189 = arith.subf %174, %188 : vector<5x32xf32>
      %cst_88 = arith.constant 9.99999974E-6 : f32
      %190 = vector.broadcast %cst_88 : f32 to vector<5x1xf32>
      %191 = arith.addf %187, %190 : vector<5x1xf32>
      %192 = math.rsqrt %191 : vector<5x1xf32>
      %193 = vector.broadcast %192 : vector<5x1xf32> to vector<5x32xf32>
      %194 = arith.mulf %189, %193 : vector<5x32xf32>
      %195 = vector.broadcast %175 : vector<1x32xf32> to vector<5x32xf32>
      %196 = arith.mulf %194, %195 : vector<5x32xf32>
      %197 = vector.broadcast %176 : vector<1x32xf32> to vector<5x32xf32>
      %198 = arith.addf %196, %197 : vector<5x32xf32>
      %c0_89 = arith.constant 0 : index
      %c0_90 = arith.constant 0 : index
      %199 = vector.load %arg23[%c0_89, %c0_90] : memref<5x32xf32, #tpu.memory_space<vmem>>, vector<5x32xf32>
      tpu.vector_store %arg23[%c0_89, %c0_90], %198 {strides = array<i32>} : memref<5x32xf32, #tpu.memory_space<vmem>>, vector<5x32xf32>,
    } else {
    }
    %c0 = arith.constant 0 : index
    %c0_1 = arith.constant 0 : index
    %3 = vector.load %arg23[%c0, %c0_1] : memref<5x32xf32, #tpu.memory_space<vmem>>, vector<5x32xf32>
    %c0_2 = arith.constant 0 : index
    %c0_3 = arith.constant 0 : index
    %c0_4 = arith.constant 0 : index
    %4 = vector.load %arg11[%c0_2, %c0_3, %c0_4] : memref<1x1x32xf32, #tpu.memory_space<vmem>>, vector<1x1x32xf32>
    %5 = vector.shape_cast %4 : vector<1x1x32xf32> to vector<1x32xf32>
    %c0_5 = arith.constant 0 : index
    %c0_6 = arith.constant 0 : index
    %c0_7 = arith.constant 0 : index
    %6 = vector.load %arg12[%c0_5, %c0_6, %c0_7] : memref<1x1x32xf32, #tpu.memory_space<vmem>>, vector<1x1x32xf32>
    %7 = vector.shape_cast %6 : vector<1x1x32xf32> to vector<1x32xf32>
    %cst = arith.constant dense<0.000000e+00> : vector<5xf32>
    %8 = vector.multi_reduction <add>, %3, %cst [1] : vector<5x32xf32> to vector<5xf32>
    %9 = vector.shape_cast %8 : vector<5xf32> to vector<5x1xf32>
    %cst_8 = arith.constant 3.200000e+01 : f32
    %10 = vector.broadcast %cst_8 : f32 to vector<5x1xf32>
    %11 = arith.divf %9, %10 : vector<5x1xf32>
    %12 = vector.broadcast %11 : vector<5x1xf32> to vector<5x32xf32>
    %13 = arith.subf %3, %12 : vector<5x32xf32>
    %14 = arith.mulf %13, %13 : vector<5x32xf32>
    %cst_9 = arith.constant dense<0.000000e+00> : vector<5xf32>
    %15 = vector.multi_reduction <add>, %14, %cst_9 [1] : vector<5x32xf32> to vector<5xf32>
    %16 = vector.shape_cast %15 : vector<5xf32> to vector<5x1xf32>
    %cst_10 = arith.constant 3.200000e+01 : f32
    %17 = vector.broadcast %cst_10 : f32 to vector<5x1xf32>
    %18 = arith.divf %16, %17 : vector<5x1xf32>
    %19 = vector.broadcast %11 : vector<5x1xf32> to vector<5x32xf32>
    %20 = arith.subf %3, %19 : vector<5x32xf32>
    %cst_11 = arith.constant 9.99999974E-6 : f32
    %21 = vector.broadcast %cst_11 : f32 to vector<5x1xf32>
    %22 = arith.addf %18, %21 : vector<5x1xf32>
    %23 = math.rsqrt %22 : vector<5x1xf32>
    %24 = vector.broadcast %23 : vector<5x1xf32> to vector<5x32xf32>
    %25 = arith.mulf %20, %24 : vector<5x32xf32>
    %26 = vector.broadcast %5 : vector<1x32xf32> to vector<5x32xf32>
    %27 = arith.mulf %25, %26 : vector<5x32xf32>
    %28 = vector.broadcast %7 : vector<1x32xf32> to vector<5x32xf32>
    %29 = arith.addf %27, %28 : vector<5x32xf32>
    %30 = arith.truncf %29 : vector<5x32xf32> to vector<5x32xbf16>
    %c0_12 = arith.constant 0 : index
    %c0_13 = arith.constant 0 : index
    %c0_14 = arith.constant 0 : index
    %31 = vector.load %arg7[%c0_12, %c0_13, %c0_14] : memref<1x32x96xbf16, #tpu.memory_space<vmem>>, vector<1x32x96xbf16>
    %32 = vector.shape_cast %31 : vector<1x32x96xbf16> to vector<32x96xbf16>
    %cst_15 = arith.constant dense<0.000000e+00> : vector<5x96xf32>
    %33 = tpu.matmul %30, %32, %cst_15 {dimension_numbers = #tpu.dot_dimension_numbers<[1], [0], [0], [1], [0, 0, 1, 1], [], []>} : vector<5x32xbf16>, vector<32x96xbf16>, vector<5x96xf32> -> vector<5x96xf32>
    %c0_16 = arith.constant 0 : index
    %c0_17 = arith.constant 0 : index
    %c0_18 = arith.constant 0 : index
    %34 = vector.load %arg8[%c0_16, %c0_17, %c0_18] : memref<1x1x96xf32, #tpu.memory_space<vmem>>, vector<1x1x96xf32>
    %35 = vector.shape_cast %34 : vector<1x1x96xf32> to vector<1x96xf32>
    %36 = vector.broadcast %35 : vector<1x96xf32> to vector<5x96xf32>
    %37 = arith.addf %33, %36 : vector<5x96xf32>
    %38 = arith.truncf %37 : vector<5x96xf32> to vector<5x96xbf16>
    %39 = vector.extract_strided_slice %38 {offsets = [0, 0], sizes = [5, 8], strides = [1, 1]} : vector<5x96xbf16> to vector<5x8xbf16>
    %40 = vector.extract_strided_slice %38 {offsets = [0, 32], sizes = [5, 8], strides = [1, 1]} : vector<5x96xbf16> to vector<5x8xbf16>
    %41 = vector.extract_strided_slice %38 {offsets = [0, 64], sizes = [5, 8], strides = [1, 1]} : vector<5x96xbf16> to vector<5x8xbf16>
    %cst_19 = arith.constant dense<0.000000e+00> : vector<5x5xf32>
    %42 = tpu.matmul %39, %40, %cst_19 {dimension_numbers = #tpu.dot_dimension_numbers<[1], [1], [0], [0], [0, 0, 1, 0], [], []>} : vector<5x8xbf16>, vector<5x8xbf16>, vector<5x5xf32> -> vector<5x5xf32>
    %cst_20 = arith.constant dense<0xFF800000> : vector<5xf32>
    %43 = vector.multi_reduction <maximumf>, %42, %cst_20 [1] : vector<5x5xf32> to vector<5xf32>
    %44 = vector.shape_cast %43 : vector<5xf32> to vector<5x1xf32>
    %45 = vector.broadcast %44 : vector<5x1xf32> to vector<5x5xf32>
    %46 = arith.subf %42, %45 : vector<5x5xf32>
    %47 = math.exp %46 : vector<5x5xf32>
    %cst_21 = arith.constant dense<0.000000e+00> : vector<5xf32>
    %48 = vector.multi_reduction <add>, %47, %cst_21 [1] : vector<5x5xf32> to vector<5xf32>
    %49 = vector.shape_cast %48 : vector<5xf32> to vector<5x1xf32>
    %50 = tpu.reciprocal %49 {approx = true} : vector<5x1xf32> -> vector<5x1xf32>
    %51 = vector.broadcast %50 : vector<5x1xf32> to vector<5x5xf32>
    %52 = arith.mulf %47, %51 : vector<5x5xf32>
    %53 = arith.truncf %52 : vector<5x5xf32> to vector<5x5xbf16>
    %cst_22 = arith.constant dense<0.000000e+00> : vector<5x8xf32>
    %54 = tpu.matmul %53, %41, %cst_22 {dimension_numbers = #tpu.dot_dimension_numbers<[1], [0], [0], [1], [0, 0, 1, 1], [], []>} : vector<5x5xbf16>, vector<5x8xbf16>, vector<5x8xf32> -> vector<5x8xf32>
    %55 = vector.extract_strided_slice %38 {offsets = [0, 8], sizes = [5, 8], strides = [1, 1]} : vector<5x96xbf16> to vector<5x8xbf16>
    %56 = vector.extract_strided_slice %38 {offsets = [0, 40], sizes = [5, 8], strides = [1, 1]} : vector<5x96xbf16> to vector<5x8xbf16>
    %57 = vector.extract_strided_slice %38 {offsets = [0, 72], sizes = [5, 8], strides = [1, 1]} : vector<5x96xbf16> to vector<5x8xbf16>
    %cst_23 = arith.constant dense<0.000000e+00> : vector<5x5xf32>
    %58 = tpu.matmul %55, %56, %cst_23 {dimension_numbers = #tpu.dot_dimension_numbers<[1], [1], [0], [0], [0, 0, 1, 0], [], []>} : vector<5x8xbf16>, vector<5x8xbf16>, vector<5x5xf32> -> vector<5x5xf32>
    %cst_24 = arith.constant dense<0xFF800000> : vector<5xf32>
    %59 = vector.multi_reduction <maximumf>, %58, %cst_24 [1] : vector<5x5xf32> to vector<5xf32>
    %60 = vector.shape_cast %59 : vector<5xf32> to vector<5x1xf32>
    %61 = vector.broadcast %60 : vector<5x1xf32> to vector<5x5xf32>
    %62 = arith.subf %58, %61 : vector<5x5xf32>
    %63 = math.exp %62 : vector<5x5xf32>
    %cst_25 = arith.constant dense<0.000000e+00> : vector<5xf32>
    %64 = vector.multi_reduction <add>, %63, %cst_25 [1] : vector<5x5xf32> to vector<5xf32>
    %65 = vector.shape_cast %64 : vector<5xf32> to vector<5x1xf32>
    %66 = tpu.reciprocal %65 {approx = true} : vector<5x1xf32> -> vector<5x1xf32>
    %67 = vector.broadcast %66 : vector<5x1xf32> to vector<5x5xf32>
    %68 = arith.mulf %63, %67 : vector<5x5xf32>
    %69 = arith.truncf %68 : vector<5x5xf32> to vector<5x5xbf16>
    %cst_26 = arith.constant dense<0.000000e+00> : vector<5x8xf32>
    %70 = tpu.matmul %69, %57, %cst_26 {dimension_numbers = #tpu.dot_dimension_numbers<[1], [0], [0], [1], [0, 0, 1, 1], [], []>} : vector<5x5xbf16>, vector<5x8xbf16>, vector<5x8xf32> -> vector<5x8xf32>
    %71 = vector.extract_strided_slice %38 {offsets = [0, 16], sizes = [5, 8], strides = [1, 1]} : vector<5x96xbf16> to vector<5x8xbf16>
    %72 = vector.extract_strided_slice %38 {offsets = [0, 48], sizes = [5, 8], strides = [1, 1]} : vector<5x96xbf16> to vector<5x8xbf16>
    %73 = vector.extract_strided_slice %38 {offsets = [0, 80], sizes = [5, 8], strides = [1, 1]} : vector<5x96xbf16> to vector<5x8xbf16>
    %cst_27 = arith.constant dense<0.000000e+00> : vector<5x5xf32>
    %74 = tpu.matmul %71, %72, %cst_27 {dimension_numbers = #tpu.dot_dimension_numbers<[1], [1], [0], [0], [0, 0, 1, 0], [], []>} : vector<5x8xbf16>, vector<5x8xbf16>, vector<5x5xf32> -> vector<5x5xf32>
    %cst_28 = arith.constant dense<0xFF800000> : vector<5xf32>
    %75 = vector.multi_reduction <maximumf>, %74, %cst_28 [1] : vector<5x5xf32> to vector<5xf32>
    %76 = vector.shape_cast %75 : vector<5xf32> to vector<5x1xf32>
    %77 = vector.broadcast %76 : vector<5x1xf32> to vector<5x5xf32>
    %78 = arith.subf %74, %77 : vector<5x5xf32>
    %79 = math.exp %78 : vector<5x5xf32>
    %cst_29 = arith.constant dense<0.000000e+00> : vector<5xf32>
    %80 = vector.multi_reduction <add>, %79, %cst_29 [1] : vector<5x5xf32> to vector<5xf32>
    %81 = vector.shape_cast %80 : vector<5xf32> to vector<5x1xf32>
    %82 = tpu.reciprocal %81 {approx = true} : vector<5x1xf32> -> vector<5x1xf32>
    %83 = vector.broadcast %82 : vector<5x1xf32> to vector<5x5xf32>
    %84 = arith.mulf %79, %83 : vector<5x5xf32>
    %85 = arith.truncf %84 : vector<5x5xf32> to vector<5x5xbf16>
    %cst_30 = arith.constant dense<0.000000e+00> : vector<5x8xf32>
    %86 = tpu.matmul %85, %73, %cst_30 {dimension_numbers = #tpu.dot_dimension_numbers<[1], [0], [0], [1], [0, 0, 1, 1], [], []>} : vector<5x5xbf16>, vector<5x8xbf16>, vector<5x8xf32> -> vector<5x8xf32>
    %87 = vector.extract_strided_slice %38 {offsets = [0, 24], sizes = [5, 8], strides = [1, 1]} : vector<5x96xbf16> to vector<5x8xbf16>
    %88 = vector.extract_strided_slice %38 {offsets = [0, 56], sizes = [5, 8], strides = [1, 1]} : vector<5x96xbf16> to vector<5x8xbf16>
    %89 = vector.extract_strided_slice %38 {offsets = [0, 88], sizes = [5, 8], strides = [1, 1]} : vector<5x96xbf16> to vector<5x8xbf16>
    %cst_31 = arith.constant dense<0.000000e+00> : vector<5x5xf32>
    %90 = tpu.matmul %87, %88, %cst_31 {dimension_numbers = #tpu.dot_dimension_numbers<[1], [1], [0], [0], [0, 0, 1, 0], [], []>} : vector<5x8xbf16>, vector<5x8xbf16>, vector<5x5xf32> -> vector<5x5xf32>
    %cst_32 = arith.constant dense<0xFF800000> : vector<5xf32>
    %91 = vector.multi_reduction <maximumf>, %90, %cst_32 [1] : vector<5x5xf32> to vector<5xf32>
    %92 = vector.shape_cast %91 : vector<5xf32> to vector<5x1xf32>
    %93 = vector.broadcast %92 : vector<5x1xf32> to vector<5x5xf32>
    %94 = arith.subf %90, %93 : vector<5x5xf32>
    %95 = math.exp %94 : vector<5x5xf32>
    %cst_33 = arith.constant dense<0.000000e+00> : vector<5xf32>
    %96 = vector.multi_reduction <add>, %95, %cst_33 [1] : vector<5x5xf32> to vector<5xf32>
    %97 = vector.shape_cast %96 : vector<5xf32> to vector<5x1xf32>
    %98 = tpu.reciprocal %97 {approx = true} : vector<5x1xf32> -> vector<5x1xf32>
    %99 = vector.broadcast %98 : vector<5x1xf32> to vector<5x5xf32>
    %100 = arith.mulf %95, %99 : vector<5x5xf32>
    %101 = arith.truncf %100 : vector<5x5xf32> to vector<5x5xbf16>
    %cst_34 = arith.constant dense<0.000000e+00> : vector<5x8xf32>
    %102 = tpu.matmul %101, %89, %cst_34 {dimension_numbers = #tpu.dot_dimension_numbers<[1], [0], [0], [1], [0, 0, 1, 1], [], []>} : vector<5x5xbf16>, vector<5x8xbf16>, vector<5x8xf32> -> vector<5x8xf32>
    %103 = tpu.concatenate %54, %70, %86, %102 in 1 : vector<5x8xf32>, vector<5x8xf32>, vector<5x8xf32>, vector<5x8xf32> -> vector<5x32xf32>
    %104 = arith.truncf %103 : vector<5x32xf32> to vector<5x32xbf16>
    %c0_35 = arith.constant 0 : index
    %c0_36 = arith.constant 0 : index
    %c0_37 = arith.constant 0 : index
    %105 = vector.load %arg9[%c0_35, %c0_36, %c0_37] : memref<1x32x32xbf16, #tpu.memory_space<vmem>>, vector<1x32x32xbf16>
    %106 = vector.shape_cast %105 : vector<1x32x32xbf16> to vector<32x32xbf16>
    %cst_38 = arith.constant dense<0.000000e+00> : vector<5x32xf32>
    %107 = tpu.matmul %104, %106, %cst_38 {dimension_numbers = #tpu.dot_dimension_numbers<[1], [0], [0], [1], [0, 0, 1, 1], [], []>} : vector<5x32xbf16>, vector<32x32xbf16>, vector<5x32xf32> -> vector<5x32xf32>
    %108 = arith.addf %3, %107 : vector<5x32xf32>
    %c0_39 = arith.constant 0 : index
    %c0_40 = arith.constant 0 : index
    %c0_41 = arith.constant 0 : index
    %109 = vector.load %arg10[%c0_39, %c0_40, %c0_41] : memref<1x1x32xf32, #tpu.memory_space<vmem>>, vector<1x1x32xf32>
    %110 = vector.shape_cast %109 : vector<1x1x32xf32> to vector<1x32xf32>
    %111 = vector.broadcast %110 : vector<1x32xf32> to vector<5x32xf32>
    %112 = arith.addf %108, %111 : vector<5x32xf32>
    %c0_42 = arith.constant 0 : index
    %c0_43 = arith.constant 0 : index
    %c0_44 = arith.constant 0 : index
    %113 = vector.load %arg13[%c0_42, %c0_43, %c0_44] : memref<1x1x32xf32, #tpu.memory_space<vmem>>, vector<1x1x32xf32>
    %114 = vector.shape_cast %113 : vector<1x1x32xf32> to vector<1x32xf32>
    %c0_45 = arith.constant 0 : index
    %c0_46 = arith.constant 0 : index
    %c0_47 = arith.constant 0 : index
    %115 = vector.load %arg14[%c0_45, %c0_46, %c0_47] : memref<1x1x32xf32, #tpu.memory_space<vmem>>, vector<1x1x32xf32>
    %116 = vector.shape_cast %115 : vector<1x1x32xf32> to vector<1x32xf32>
    %cst_48 = arith.constant dense<0.000000e+00> : vector<5xf32>
    %117 = vector.multi_reduction <add>, %112, %cst_48 [1] : vector<5x32xf32> to vector<5xf32>
    %118 = vector.shape_cast %117 : vector<5xf32> to vector<5x1xf32>
    %cst_49 = arith.constant 3.200000e+01 : f32
    %119 = vector.broadcast %cst_49 : f32 to vector<5x1xf32>
    %120 = arith.divf %118, %119 : vector<5x1xf32>
    %121 = vector.broadcast %120 : vector<5x1xf32> to vector<5x32xf32>
    %122 = arith.subf %112, %121 : vector<5x32xf32>
    %123 = arith.mulf %122, %122 : vector<5x32xf32>
    %cst_50 = arith.constant dense<0.000000e+00> : vector<5xf32>
    %124 = vector.multi_reduction <add>, %123, %cst_50 [1] : vector<5x32xf32> to vector<5xf32>
    %125 = vector.shape_cast %124 : vector<5xf32> to vector<5x1xf32>
    %cst_51 = arith.constant 3.200000e+01 : f32
    %126 = vector.broadcast %cst_51 : f32 to vector<5x1xf32>
    %127 = arith.divf %125, %126 : vector<5x1xf32>
    %128 = vector.broadcast %120 : vector<5x1xf32> to vector<5x32xf32>
    %129 = arith.subf %112, %128 : vector<5x32xf32>
    %cst_52 = arith.constant 9.99999974E-6 : f32
    %130 = vector.broadcast %cst_52 : f32 to vector<5x1xf32>
    %131 = arith.addf %127, %130 : vector<5x1xf32>
    %132 = math.rsqrt %131 : vector<5x1xf32>
    %133 = vector.broadcast %132 : vector<5x1xf32> to vector<5x32xf32>
    %134 = arith.mulf %129, %133 : vector<5x32xf32>
    %135 = vector.broadcast %114 : vector<1x32xf32> to vector<5x32xf32>
    %136 = arith.mulf %134, %135 : vector<5x32xf32>
    %137 = vector.broadcast %116 : vector<1x32xf32> to vector<5x32xf32>
    %138 = arith.addf %136, %137 : vector<5x32xf32>
    %139 = arith.truncf %138 : vector<5x32xf32> to vector<5x32xbf16>
    %c0_53 = arith.constant 0 : index
    %c0_54 = arith.constant 0 : index
    %c0_55 = arith.constant 0 : index
    %140 = vector.load %arg15[%c0_53, %c0_54, %c0_55] : memref<1x32x128xbf16, #tpu.memory_space<vmem>>, vector<1x32x128xbf16>
    %141 = vector.shape_cast %140 : vector<1x32x128xbf16> to vector<32x128xbf16>
    %cst_56 = arith.constant dense<0.000000e+00> : vector<5x128xf32>
    %142 = tpu.matmul %139, %141, %cst_56 {dimension_numbers = #tpu.dot_dimension_numbers<[1], [0], [0], [1], [0, 0, 1, 1], [], []>} : vector<5x32xbf16>, vector<32x128xbf16>, vector<5x128xf32> -> vector<5x128xf32>
    %c0_57 = arith.constant 0 : index
    %c0_58 = arith.constant 0 : index
    %c0_59 = arith.constant 0 : index
    %143 = vector.load %arg16[%c0_57, %c0_58, %c0_59] : memref<1x1x128xf32, #tpu.memory_space<vmem>>, vector<1x1x128xf32>
    %144 = vector.shape_cast %143 : vector<1x1x128xf32> to vector<1x128xf32>
    %145 = vector.broadcast %144 : vector<1x128xf32> to vector<5x128xf32>
    %146 = arith.addf %142, %145 : vector<5x128xf32>
    %cst_60 = arith.constant 1.702000e+00 : f32
    %147 = vector.broadcast %cst_60 : f32 to vector<5x128xf32>
    %148 = arith.mulf %147, %146 : vector<5x128xf32>
    %149 = arith.negf %148 : vector<5x128xf32>
    %150 = math.exp %149 : vector<5x128xf32>
    %cst_61 = arith.constant 1.000000e+00 : f32
    %151 = vector.broadcast %cst_61 : f32 to vector<5x128xf32>
    %152 = arith.addf %151, %150 : vector<5x128xf32>
    %153 = arith.divf %151, %152 : vector<5x128xf32>
    %154 = arith.mulf %146, %153 : vector<5x128xf32>
    %155 = arith.truncf %154 : vector<5x128xf32> to vector<5x128xbf16>
    %c0_62 = arith.constant 0 : index
    %c0_63 = arith.constant 0 : index
    %c0_64 = arith.constant 0 : index
    %156 = vector.load %arg17[%c0_62, %c0_63, %c0_64] : memref<1x128x32xbf16, #tpu.memory_space<vmem>>, vector<1x128x32xbf16>
    %157 = vector.shape_cast %156 : vector<1x128x32xbf16> to vector<128x32xbf16>
    %cst_65 = arith.constant dense<0.000000e+00> : vector<5x32xf32>
    %158 = tpu.matmul %155, %157, %cst_65 {dimension_numbers = #tpu.dot_dimension_numbers<[1], [0], [0], [1], [0, 0, 1, 1], [], []>} : vector<5x128xbf16>, vector<128x32xbf16>, vector<5x32xf32> -> vector<5x32xf32>
    %159 = arith.addf %112, %158 : vector<5x32xf32>
    %c0_66 = arith.constant 0 : index
    %c0_67 = arith.constant 0 : index
    %c0_68 = arith.constant 0 : index
    %160 = vector.load %arg18[%c0_66, %c0_67, %c0_68] : memref<1x1x32xf32, #tpu.memory_space<vmem>>, vector<1x1x32xf32>
    %161 = vector.shape_cast %160 : vector<1x1x32xf32> to vector<1x32xf32>
    %162 = vector.broadcast %161 : vector<1x32xf32> to vector<5x32xf32>
    %163 = arith.addf %159, %162 : vector<5x32xf32>
    %c0_69 = arith.constant 0 : index
    %c0_70 = arith.constant 0 : index
    %164 = vector.load %arg23[%c0_69, %c0_70] : memref<5x32xf32, #tpu.memory_space<vmem>>, vector<5x32xf32>
    tpu.vector_store %arg23[%c0_69, %c0_70], %163 {strides = array<i32>} : memref<5x32xf32, #tpu.memory_space<vmem>>, vector<5x32xf32>,
    %c1_i32 = arith.constant 1 : i32
    %165 = arith.cmpi eq, %arg1, %c1_i32 : i32
    %166 = arith.extui %165 : i1 to i32
    %c0_i32_71 = arith.constant 0 : i32
    %167 = arith.cmpi ne, %166, %c0_i32_71 : i32
    scf.if %167 {
      %168 = vector.extract_strided_slice %163 {offsets = [0, 0], sizes = [1, 32], strides = [1, 1]} : vector<5x32xf32> to vector<1x32xf32>
      %c0_72 = arith.constant 0 : index
      %c0_73 = arith.constant 0 : index
      %169 = vector.load %arg19[%c0_72, %c0_73] : memref<1x32xf32, #tpu.memory_space<vmem>>, vector<1x32xf32>
      %c0_74 = arith.constant 0 : index
      %c0_75 = arith.constant 0 : index
      %170 = vector.load %arg20[%c0_74, %c0_75] : memref<1x32xf32, #tpu.memory_space<vmem>>, vector<1x32xf32>
      %cst_76 = arith.constant dense<0.000000e+00> : vector<1xf32>
      %171 = vector.multi_reduction <add>, %168, %cst_76 [1] : vector<1x32xf32> to vector<1xf32>
      %172 = vector.shape_cast %171 : vector<1xf32> to vector<1x1xf32>
      %cst_77 = arith.constant 3.200000e+01 : f32
      %173 = vector.broadcast %cst_77 : f32 to vector<1x1xf32>
      %174 = arith.divf %172, %173 : vector<1x1xf32>
      %175 = vector.broadcast %174 : vector<1x1xf32> to vector<1x32xf32>
      %176 = arith.subf %168, %175 : vector<1x32xf32>
      %177 = arith.mulf %176, %176 : vector<1x32xf32>
      %cst_78 = arith.constant dense<0.000000e+00> : vector<1xf32>
      %178 = vector.multi_reduction <add>, %177, %cst_78 [1] : vector<1x32xf32> to vector<1xf32>
      %179 = vector.shape_cast %178 : vector<1xf32> to vector<1x1xf32>
      %cst_79 = arith.constant 3.200000e+01 : f32
      %180 = vector.broadcast %cst_79 : f32 to vector<1x1xf32>
      %181 = arith.divf %179, %180 : vector<1x1xf32>
      %182 = vector.broadcast %174 : vector<1x1xf32> to vector<1x32xf32>
      %183 = arith.subf %168, %182 : vector<1x32xf32>
      %cst_80 = arith.constant 9.99999974E-6 : f32
      %184 = vector.broadcast %cst_80 : f32 to vector<1x1xf32>
      %185 = arith.addf %181, %184 : vector<1x1xf32>
      %186 = math.rsqrt %185 : vector<1x1xf32>
      %187 = vector.broadcast %186 : vector<1x1xf32> to vector<1x32xf32>
      %188 = arith.mulf %183, %187 : vector<1x32xf32>
      %189 = arith.mulf %188, %169 : vector<1x32xf32>
      %190 = arith.addf %189, %170 : vector<1x32xf32>
      %191 = arith.truncf %190 : vector<1x32xf32> to vector<1x32xbf16>
      %c0_81 = arith.constant 0 : index
      %c0_82 = arith.constant 0 : index
      %192 = vector.load %arg21[%c0_81, %c0_82] : memref<32x16xbf16, #tpu.memory_space<vmem>>, vector<32x16xbf16>
      %cst_83 = arith.constant dense<0.000000e+00> : vector<1x16xf32>
      %193 = tpu.matmul %191, %192, %cst_83 {dimension_numbers = #tpu.dot_dimension_numbers<[1], [0], [0], [1], [0, 0, 1, 1], [], []>} : vector<1x32xbf16>, vector<32x16xbf16>, vector<1x16xf32> -> vector<1x16xf32>
      %c0_84 = arith.constant 0 : index
      %c0_85 = arith.constant 0 : index
      %c0_86 = arith.constant 0 : index
      %194 = vector.load %arg22[%c0_84, %c0_85, %c0_86] : memref<1x1x16xf32, #tpu.memory_space<vmem>>, vector<1x1x16xf32>
      %195 = vector.shape_cast %194 : vector<1x1x16xf32> to vector<1x16xf32>
      %196 = vector.shape_cast %193 : vector<1x16xf32> to vector<1x1x16xf32>
      tpu.vector_store %arg22[%c0_84, %c0_85, %c0_86], %196 {strides = array<i32>} : memref<1x1x16xf32, #tpu.memory_space<vmem>>, vector<1x1x16xf32>,
    } else {
    }
    return
  }
  func.func @transform_0(%arg0: i32, %arg1: i32) -> (i32, i32, i32) {
    %c0_i32 = arith.constant 0 : i32
    %c0_i32_0 = arith.constant 0 : i32
    %c0_i32_1 = arith.constant 0 : i32
    return %arg0, %c0_i32, %c0_i32_0 : i32, i32, i32
  }
  func.func @transform_1(%arg0: i32, %arg1: i32) -> (i32, i32) {
    %c0_i32 = arith.constant 0 : i32
    %c0_i32_0 = arith.constant 0 : i32
    %c0_i32_1 = arith.constant 0 : i32
    return %c0_i32, %c0_i32_0 : i32, i32
  }
  func.func @transform_2(%arg0: i32, %arg1: i32) -> (i32, i32) {
    %c0_i32 = arith.constant 0 : i32
    %c0_i32_0 = arith.constant 0 : i32
    %c0_i32_1 = arith.constant 0 : i32
    return %c0_i32, %c0_i32_0 : i32, i32
  }
  func.func @transform_3(%arg0: i32, %arg1: i32) -> (i32, i32) {
    %c0_i32 = arith.constant 0 : i32
    %c0_i32_0 = arith.constant 0 : i32
    %c0_i32_1 = arith.constant 0 : i32
    return %c0_i32, %c0_i32_0 : i32, i32
  }
  func.func @transform_4(%arg0: i32, %arg1: i32) -> (i32, i32) {
    %c0_i32 = arith.constant 0 : i32
    %c0_i32_0 = arith.constant 0 : i32
    %c0_i32_1 = arith.constant 0 : i32
    return %c0_i32, %c0_i32_0 : i32, i32
  }
  func.func @transform_5(%arg0: i32, %arg1: i32) -> (i32, i32, i32) {
    %c0_i32 = arith.constant 0 : i32
    %c0_i32_0 = arith.constant 0 : i32
    %c0_i32_1 = arith.constant 0 : i32
    return %arg1, %c0_i32, %c0_i32_0 : i32, i32, i32
  }
  func.func @transform_6(%arg0: i32, %arg1: i32) -> (i32, i32, i32) {
    %c0_i32 = arith.constant 0 : i32
    %c0_i32_0 = arith.constant 0 : i32
    %c0_i32_1 = arith.constant 0 : i32
    return %arg1, %c0_i32, %c0_i32_0 : i32, i32, i32
  }
  func.func @transform_7(%arg0: i32, %arg1: i32) -> (i32, i32, i32) {
    %c0_i32 = arith.constant 0 : i32
    %c0_i32_0 = arith.constant 0 : i32
    %c0_i32_1 = arith.constant 0 : i32
    return %arg1, %c0_i32, %c0_i32_0 : i32, i32, i32
  }
  func.func @transform_8(%arg0: i32, %arg1: i32) -> (i32, i32, i32) {
    %c0_i32 = arith.constant 0 : i32
    %c0_i32_0 = arith.constant 0 : i32
    %c0_i32_1 = arith.constant 0 : i32
    return %arg1, %c0_i32, %c0_i32_0 : i32, i32, i32
  }
  func.func @transform_9(%arg0: i32, %arg1: i32) -> (i32, i32, i32) {
    %c0_i32 = arith.constant 0 : i32
    %c0_i32_0 = arith.constant 0 : i32
    %c0_i32_1 = arith.constant 0 : i32
    return %arg1, %c0_i32, %c0_i32_0 : i32, i32, i32
  }
  func.func @transform_10(%arg0: i32, %arg1: i32) -> (i32, i32, i32) {
    %c0_i32 = arith.constant 0 : i32
    %c0_i32_0 = arith.constant 0 : i32
    %c0_i32_1 = arith.constant 0 : i32
    return %arg1, %c0_i32, %c0_i32_0 : i32, i32, i32
  }
  func.func @transform_11(%arg0: i32, %arg1: i32) -> (i32, i32, i32) {
    %c0_i32 = arith.constant 0 : i32
    %c0_i32_0 = arith.constant 0 : i32
    %c0_i32_1 = arith.constant 0 : i32
    return %arg1, %c0_i32, %c0_i32_0 : i32, i32, i32
  }
  func.func @transform_12(%arg0: i32, %arg1: i32) -> (i32, i32, i32) {
    %c0_i32 = arith.constant 0 : i32
    %c0_i32_0 = arith.constant 0 : i32
    %c0_i32_1 = arith.constant 0 : i32
    return %arg1, %c0_i32, %c0_i32_0 : i32, i32, i32
  }
  func.func @transform_13(%arg0: i32, %arg1: i32) -> (i32, i32, i32) {
    %c0_i32 = arith.constant 0 : i32
    %c0_i32_0 = arith.constant 0 : i32
    %c0_i32_1 = arith.constant 0 : i32
    return %arg1, %c0_i32, %c0_i32_0 : i32, i32, i32
  }
  func.func @transform_14(%arg0: i32, %arg1: i32) -> (i32, i32, i32) {
    %c0_i32 = arith.constant 0 : i32
    %c0_i32_0 = arith.constant 0 : i32
    %c0_i32_1 = arith.constant 0 : i32
    return %arg1, %c0_i32, %c0_i32_0 : i32, i32, i32
  }
  func.func @transform_15(%arg0: i32, %arg1: i32) -> (i32, i32, i32) {
    %c0_i32 = arith.constant 0 : i32
    %c0_i32_0 = arith.constant 0 : i32
    %c0_i32_1 = arith.constant 0 : i32
    return %arg1, %c0_i32, %c0_i32_0 : i32, i32, i32
  }
  func.func @transform_16(%arg0: i32, %arg1: i32) -> (i32, i32, i32) {
    %c0_i32 = arith.constant 0 : i32
    %c0_i32_0 = arith.constant 0 : i32
    %c0_i32_1 = arith.constant 0 : i32
    return %arg1, %c0_i32, %c0_i32_0 : i32, i32, i32
  }
  func.func @transform_17(%arg0: i32, %arg1: i32) -> (i32, i32) {
    %c0_i32 = arith.constant 0 : i32
    %c0_i32_0 = arith.constant 0 : i32
    %c0_i32_1 = arith.constant 0 : i32
    return %c0_i32, %c0_i32_0 : i32, i32
  }
  func.func @transform_18(%arg0: i32, %arg1: i32) -> (i32, i32) {
    %c0_i32 = arith.constant 0 : i32
    %c0_i32_0 = arith.constant 0 : i32
    %c0_i32_1 = arith.constant 0 : i32
    return %c0_i32, %c0_i32_0 : i32, i32
  }
  func.func @transform_19(%arg0: i32, %arg1: i32) -> (i32, i32) {
    %c0_i32 = arith.constant 0 : i32
    %c0_i32_0 = arith.constant 0 : i32
    %c0_i32_1 = arith.constant 0 : i32
    return %c0_i32, %c0_i32_0 : i32, i32
  }
  func.func @transform_20(%arg0: i32, %arg1: i32) -> (i32, i32, i32) {
    %c0_i32 = arith.constant 0 : i32
    %c0_i32_0 = arith.constant 0 : i32
    %c0_i32_1 = arith.constant 0 : i32
    return %arg0, %c0_i32, %c0_i32_0 : i32, i32, i32
  }
}

</mosaic_0001>

<llo_original>
// kernel: tpu_custom_call.1
$region0: #{tpu_custom_call.1}
  #allocation0 [shape = 'u32[]', space=smem, size = 0x4, offset = 0x4, fixed_abs, tag = 'smem constant byte address 0x4 - core index']
  #allocation1 [shape = 'u32[144,128]{1,0:T(1,128)}', space=vmem, size = 0x12000, scoped, tag = 'internal scratch']
  #allocation2 [shape = 'f32[5,32]{1,0:T(8,128)}', space=vmem, size = 0x1000, scoped, tag = 'scratch operand']
  %s0 = inlined_call_operand.vmem [shape: f32[2,5,192], index: 0, kind: input, shape index: {}]
  %s1 = inlined_call_operand.vmem [shape: bf16[192,32], index: 1, kind: input, shape index: {}]
  %s2 = inlined_call_operand.vmem [shape: f32[5,32], index: 2, kind: input, shape index: {}]
  %s3 = inlined_call_operand.vmem [shape: f32[1,32], index: 3, kind: input, shape index: {}]
  %s4 = inlined_call_operand.vmem [shape: f32[1,32], index: 4, kind: input, shape index: {}]
  %s5 = inlined_call_operand.vmem [shape: bf16[2,32,96], index: 5, kind: input, shape index: {}]
  %s6 = inlined_call_operand.vmem [shape: f32[2,1,96], index: 6, kind: input, shape index: {}]
  %s7 = inlined_call_operand.vmem [shape: bf16[2,32,32], index: 7, kind: input, shape index: {}]
  %s8 = inlined_call_operand.vmem [shape: f32[2,1,32], index: 8, kind: input, shape index: {}]
  %s9 = inlined_call_operand.vmem [shape: f32[2,1,32], index: 9, kind: input, shape index: {}]
  %s10 = inlined_call_operand.vmem [shape: f32[2,1,32], index: 10, kind: input, shape index: {}]
  %s11 = inlined_call_operand.vmem [shape: f32[2,1,32], index: 11, kind: input, shape index: {}]
  %s12 = inlined_call_operand.vmem [shape: f32[2,1,32], index: 12, kind: input, shape index: {}]
  %s13 = inlined_call_operand.vmem [shape: bf16[2,32,128], index: 13, kind: input, shape index: {}]
  %s14 = inlined_call_operand.vmem [shape: f32[2,1,128], index: 14, kind: input, shape index: {}]
  %s15 = inlined_call_operand.vmem [shape: bf16[2,128,32], index: 15, kind: input, shape index: {}]
  %s16 = inlined_call_operand.vmem [shape: f32[2,1,32], index: 16, kind: input, shape index: {}]
  %s17 = inlined_call_operand.vmem [shape: f32[1,32], index: 17, kind: input, shape index: {}]
  %s18 = inlined_call_operand.vmem [shape: f32[1,32], index: 18, kind: input, shape index: {}]
  %s19 = inlined_call_operand.vmem [shape: bf16[32,16], index: 19, kind: input, shape index: {}]
  %s20 = inlined_call_operand.hbm [shape: f32[2,1,16], index: 20, kind: output, shape index: {}]
  %s21 = sld [smem:[#allocation0]]
  $region121: #{tpu_custom_call.1} parent=0
    _
  %s23 = ssub.s32 1, %s21
  %s24 = scalar_select 0, %s23, %s21
  $region1: #{tpu_custom_call.1} parent=0
    #allocation3 [shape = 'u8[1024]{0}', space=vmem, size = 0x400, scoped, tag = 'output window, operand 0']
    #allocation4 [shape = 's32[2]{0}', space=sflag, size = 0x8, scoped, tag = 'scoped memory for tpu_custom_call.1']
    %25 = vsyncpa [#allocation4], 0
    %s26 = scalar_lea.sflag [#allocation4], 1
    %27 = vsyncpa %s26, 0
    loop: start=0, step=1, limit=6
    $region2: #{tpu_custom_call.1} parent=1 // loop_pre_header
      _
    $region3: #{tpu_custom_call.1} parent=1 // loop_header
      %s29 = sphi 0, %s33
      %p30 = scmp.ge.s32.totalorder %s29, 6
      %s36 = sphi 0, %s48
      %s37 = sphi 0, %s44
      %s38 = sphi 0, %s36
      %s39 = sphi 0, %s37
      %s40 = sphi 0, %s38
      %s41 = sphi 0, %s39
      %s51 = sphi 0, %s53
      %s54 = sphi 0, %s51
      %s55 = sphi 0, %s54
      %s71 = sphi 0, %s55
      %s75 = sphi 0, %s75
      %s77 = sphi 0, %s75
      %s78 = sphi 0, %s77
      %s92 = sphi 0, %s78
      %s96 = sphi 0, %s96
      %s98 = sphi 0, %s96
      %s99 = sphi 0, %s98
      %s113 = sphi 0, %s99
      %s117 = sphi 0, %s117
      %s119 = sphi 0, %s117
      %s120 = sphi 0, %s119
      %s134 = sphi 0, %s120
      %s138 = sphi 0, %s138
      %s140 = sphi 0, %s138
      %s141 = sphi 0, %s140
      %s155 = sphi 0, %s141
      %s161 = sphi 0, %s163
      %s164 = sphi 0, %s161
      %s165 = sphi 0, %s164
      %s181 = sphi 0, %s165
      %s187 = sphi 0, %s189
      %s190 = sphi 0, %s187
      %s191 = sphi 0, %s190
      %s207 = sphi 0, %s191
      %s213 = sphi 0, %s215
      %s216 = sphi 0, %s213
      %s217 = sphi 0, %s216
      %s233 = sphi 0, %s217
      %s239 = sphi 0, %s241
      %s242 = sphi 0, %s239
      %s243 = sphi 0, %s242
      %s259 = sphi 0, %s243
      %s265 = sphi 0, %s267
      %s268 = sphi 0, %s265
      %s269 = sphi 0, %s268
      %s285 = sphi 0, %s269
      %s291 = sphi 0, %s293
      %s294 = sphi 0, %s291
      %s295 = sphi 0, %s294
      %s311 = sphi 0, %s295
      %s317 = sphi 0, %s319
      %s320 = sphi 0, %s317
      %s321 = sphi 0, %s320
      %s337 = sphi 0, %s321
      %s343 = sphi 0, %s345
      %s346 = sphi 0, %s343
      %s347 = sphi 0, %s346
      %s363 = sphi 0, %s347
      %s369 = sphi 0, %s371
      %s372 = sphi 0, %s369
      %s373 = sphi 0, %s372
      %s389 = sphi 0, %s373
      %s395 = sphi 0, %s397
      %s398 = sphi 0, %s395
      %s399 = sphi 0, %s398
      %s415 = sphi 0, %s399
      %s421 = sphi 0, %s423
      %s424 = sphi 0, %s421
      %s425 = sphi 0, %s424
      %s441 = sphi 0, %s425
      %s447 = sphi 0, %s449
      %s450 = sphi 0, %s447
      %s451 = sphi 0, %s450
      %s467 = sphi 0, %s451
      %s471 = sphi 0, %s471
      %s473 = sphi 0, %s471
      %s474 = sphi 0, %s473
      %s488 = sphi 0, %s474
      %s492 = sphi 0, %s492
      %s494 = sphi 0, %s492
      %s495 = sphi 0, %s494
      %s509 = sphi 0, %s495
      %s513 = sphi 0, %s513
      %s515 = sphi 0, %s513
      %s516 = sphi 0, %s515
      %s530 = sphi 0, %s516
      %s536 = sphi 0, %s538
      %s539 = sphi 0, %s536
      %s540 = sphi 0, %s539
      %s556 = sphi 0, %s540
    $region4: #{tpu_custom_call.1} parent=1 // loop_header_branch
      %32 = sbr.rel (%p30) target = $region8
    $region5: #{tpu_custom_call.1} parent=1 // loop_body
      %s34 = ssub.s32 %s29, 1
      %s35 = ssub.s32 %s29, 2
      %s42 = sadd.s32 1, %s37
      %p43 = scmp.ge.s32.totalorder %s42, 2
      %s44 = scalar_select %p43, 0, %s42
      %s45 = sadd.s32 1, %s36
      %s46 = scalar_select %p43, %s45, %s36
      %p47 = scmp.ge.s32.totalorder %s46, 2
      %s48 = scalar_select %p47, 0, %s46
      %s49 = ssub.s32 %s36, %s48
      %p50 = scmp.eq.s32.totalorder %s49, 0
      %s52 = sadd.s32 %s51, 1
      %s53 = scalar_select %p50, %s51, %s52
      %p56 = pneg %p50
      %p57 = scmp.eq.s32.totalorder %s29, 3
      %p58 = por %p56, %p57
      %p59 = scmp.ne.s32.totalorder %s51, %s54
      %p60 = scmp.eq.s32.totalorder %s29, 0
      %p61 = por %p59, %p60
      %p62 = scmp.ne.s32.totalorder %s51, %s54
      %p63 = scmp.eq.s32.totalorder %s34, 3
      %p64 = por %p62, %p63
      %p65 = scmp.ne.s32.totalorder %s54, %s55
      %p66 = scmp.eq.s32.totalorder %s34, 0
      %p67 = por %p65, %p66
      %p68 = scmp.ne.s32.totalorder %s54, %s55
      %p69 = scmp.eq.s32.totalorder %s35, 3
      %p70 = por %p68, %p69
      %p72 = scmp.ne.s32.totalorder %s55, %s71
      %p73 = scmp.eq.s32.totalorder %s35, 0
      %p74 = por %p72, %p73
      %s76 = sadd.s32 %s75, 1
      %p79 = scmp.eq.s32.totalorder %s29, 3
      %p80 = scmp.ne.s32.totalorder %s75, %s77
      %p81 = scmp.eq.s32.totalorder %s29, 0
      %p82 = por %p80, %p81
      %p83 = scmp.ne.s32.totalorder %s75, %s77
      %p84 = scmp.eq.s32.totalorder %s34, 3
      %p85 = por %p83, %p84
      %p86 = scmp.ne.s32.totalorder %s77, %s78
      %p87 = scmp.eq.s32.totalorder %s34, 0
      %p88 = por %p86, %p87
      %p89 = scmp.ne.s32.totalorder %s77, %s78
      %p90 = scmp.eq.s32.totalorder %s35, 3
      %p91 = por %p89, %p90
      %p93 = scmp.ne.s32.totalorder %s78, %s92
      %p94 = scmp.eq.s32.totalorder %s35, 0
      %p95 = por %p93, %p94
      %s97 = sadd.s32 %s96, 1
      %p100 = scmp.eq.s32.totalorder %s29, 3
      %p101 = scmp.ne.s32.totalorder %s96, %s98
      %p102 = scmp.eq.s32.totalorder %s29, 0
      %p103 = por %p101, %p102
      %p104 = scmp.ne.s32.totalorder %s96, %s98
      %p105 = scmp.eq.s32.totalorder %s34, 3
      %p106 = por %p104, %p105
      %p107 = scmp.ne.s32.totalorder %s98, %s99
      %p108 = scmp.eq.s32.totalorder %s34, 0
      %p109 = por %p107, %p108
      %p110 = scmp.ne.s32.totalorder %s98, %s99
      %p111 = scmp.eq.s32.totalorder %s35, 3
      %p112 = por %p110, %p111
      %p114 = scmp.ne.s32.totalorder %s99, %s113
      %p115 = scmp.eq.s32.totalorder %s35, 0
      %p116 = por %p114, %p115
      %s118 = sadd.s32 %s117, 1
      %p121 = scmp.eq.s32.totalorder %s29, 3
      %p122 = scmp.ne.s32.totalorder %s117, %s119
      %p123 = scmp.eq.s32.totalorder %s29, 0
      %p124 = por %p122, %p123
      %p125 = scmp.ne.s32.totalorder %s117, %s119
      %p126 = scmp.eq.s32.totalorder %s34, 3
      %p127 = por %p125, %p126
      %p128 = scmp.ne.s32.totalorder %s119, %s120
      %p129 = scmp.eq.s32.totalorder %s34, 0
      %p130 = por %p128, %p129
      %p131 = scmp.ne.s32.totalorder %s119, %s120
      %p132 = scmp.eq.s32.totalorder %s35, 3
      %p133 = por %p131, %p132
      %p135 = scmp.ne.s32.totalorder %s120, %s134
      %p136 = scmp.eq.s32.totalorder %s35, 0
      %p137 = por %p135, %p136
      %s139 = sadd.s32 %s138, 1
      %p142 = scmp.eq.s32.totalorder %s29, 3
      %p143 = scmp.ne.s32.totalorder %s138, %s140
      %p144 = scmp.eq.s32.totalorder %s29, 0
      %p145 = por %p143, %p144
      %p146 = scmp.ne.s32.totalorder %s138, %s140
      %p147 = scmp.eq.s32.totalorder %s34, 3
      %p148 = por %p146, %p147
      %p149 = scmp.ne.s32.totalorder %s140, %s141
      %p150 = scmp.eq.s32.totalorder %s34, 0
      %p151 = por %p149, %p150
      %p152 = scmp.ne.s32.totalorder %s140, %s141
      %p153 = scmp.eq.s32.totalorder %s35, 3
      %p154 = por %p152, %p153
      %p156 = scmp.ne.s32.totalorder %s141, %s155
      %p157 = scmp.eq.s32.totalorder %s35, 0
      %p158 = por %p156, %p157
      %s159 = ssub.s32 %s37, %s44
      %p160 = scmp.eq.s32.totalorder %s159, 0
      %s162 = sadd.s32 %s161, 1
      %s163 = scalar_select %p160, %s161, %s162
      %p166 = pneg %p160
      %p167 = scmp.eq.s32.totalorder %s29, 3
      %p168 = por %p166, %p167
      %p169 = scmp.ne.s32.totalorder %s161, %s164
      %p170 = scmp.eq.s32.totalorder %s29, 0
      %p171 = por %p169, %p170
      %p172 = scmp.ne.s32.totalorder %s161, %s164
      %p173 = scmp.eq.s32.totalorder %s34, 3
      %p174 = por %p172, %p173
      %p175 = scmp.ne.s32.totalorder %s164, %s165
      %p176 = scmp.eq.s32.totalorder %s34, 0
      %p177 = por %p175, %p176
      %p178 = scmp.ne.s32.totalorder %s164, %s165
      %p179 = scmp.eq.s32.totalorder %s35, 3
      %p180 = por %p178, %p179
      %p182 = scmp.ne.s32.totalorder %s165, %s181
      %p183 = scmp.eq.s32.totalorder %s35, 0
      %p184 = por %p182, %p183
      %s185 = ssub.s32 %s37, %s44
      %p186 = scmp.eq.s32.totalorder %s185, 0
      %s188 = sadd.s32 %s187, 1
      %s189 = scalar_select %p186, %s187, %s188
      %p192 = pneg %p186
      %p193 = scmp.eq.s32.totalorder %s29, 3
      %p194 = por %p192, %p193
      %p195 = scmp.ne.s32.totalorder %s187, %s190
      %p196 = scmp.eq.s32.totalorder %s29, 0
      %p197 = por %p195, %p196
      %p198 = scmp.ne.s32.totalorder %s187, %s190
      %p199 = scmp.eq.s32.totalorder %s34, 3
      %p200 = por %p198, %p199
      %p201 = scmp.ne.s32.totalorder %s190, %s191
      %p202 = scmp.eq.s32.totalorder %s34, 0
      %p203 = por %p201, %p202
      %p204 = scmp.ne.s32.totalorder %s190, %s191
      %p205 = scmp.eq.s32.totalorder %s35, 3
      %p206 = por %p204, %p205
      %p208 = scmp.ne.s32.totalorder %s191, %s207
      %p209 = scmp.eq.s32.totalorder %s35, 0
      %p210 = por %p208, %p209
      %s211 = ssub.s32 %s37, %s44
      %p212 = scmp.eq.s32.totalorder %s211, 0
      %s214 = sadd.s32 %s213, 1
      %s215 = scalar_select %p212, %s213, %s214
      %p218 = pneg %p212
      %p219 = scmp.eq.s32.totalorder %s29, 3
      %p220 = por %p218, %p219
      %p221 = scmp.ne.s32.totalorder %s213, %s216
      %p222 = scmp.eq.s32.totalorder %s29, 0
      %p223 = por %p221, %p222
      %p224 = scmp.ne.s32.totalorder %s213, %s216
      %p225 = scmp.eq.s32.totalorder %s34, 3
      %p226 = por %p224, %p225
      %p227 = scmp.ne.s32.totalorder %s216, %s217
      %p228 = scmp.eq.s32.totalorder %s34, 0
      %p229 = por %p227, %p228
      %p230 = scmp.ne.s32.totalorder %s216, %s217
      %p231 = scmp.eq.s32.totalorder %s35, 3
      %p232 = por %p230, %p231
      %p234 = scmp.ne.s32.totalorder %s217, %s233
      %p235 = scmp.eq.s32.totalorder %s35, 0
      %p236 = por %p234, %p235
      %s237 = ssub.s32 %s37, %s44
      %p238 = scmp.eq.s32.totalorder %s237, 0
      %s240 = sadd.s32 %s239, 1
      %s241 = scalar_select %p238, %s239, %s240
      %p244 = pneg %p238
      %p245 = scmp.eq.s32.totalorder %s29, 3
      %p246 = por %p244, %p245
      %p247 = scmp.ne.s32.totalorder %s239, %s242
      %p248 = scmp.eq.s32.totalorder %s29, 0
      %p249 = por %p247, %p248
      %p250 = scmp.ne.s32.totalorder %s239, %s242
      %p251 = scmp.eq.s32.totalorder %s34, 3
      %p252 = por %p250, %p251
      %p253 = scmp.ne.s32.totalorder %s242, %s243
      %p254 = scmp.eq.s32.totalorder %s34, 0
      %p255 = por %p253, %p254
      %p256 = scmp.ne.s32.totalorder %s242, %s243
      %p257 = scmp.eq.s32.totalorder %s35, 3
      %p258 = por %p256, %p257
      %p260 = scmp.ne.s32.totalorder %s243, %s259
      %p261 = scmp.eq.s32.totalorder %s35, 0
      %p262 = por %p260, %p261
      %s263 = ssub.s32 %s37, %s44
      %p264 = scmp.eq.s32.totalorder %s263, 0
      %s266 = sadd.s32 %s265, 1
      %s267 = scalar_select %p264, %s265, %s266
      %p270 = pneg %p264
      %p271 = scmp.eq.s32.totalorder %s29, 3
      %p272 = por %p270, %p271
      %p273 = scmp.ne.s32.totalorder %s265, %s268
      %p274 = scmp.eq.s32.totalorder %s29, 0
      %p275 = por %p273, %p274
      %p276 = scmp.ne.s32.totalorder %s265, %s268
      %p277 = scmp.eq.s32.totalorder %s34, 3
      %p278 = por %p276, %p277
      %p279 = scmp.ne.s32.totalorder %s268, %s269
      %p280 = scmp.eq.s32.totalorder %s34, 0
      %p281 = por %p279, %p280
      %p282 = scmp.ne.s32.totalorder %s268, %s269
      %p283 = scmp.eq.s32.totalorder %s35, 3
      %p284 = por %p282, %p283
      %p286 = scmp.ne.s32.totalorder %s269, %s285
      %p287 = scmp.eq.s32.totalorder %s35, 0
      %p288 = por %p286, %p287
      %s289 = ssub.s32 %s37, %s44
      %p290 = scmp.eq.s32.totalorder %s289, 0
      %s292 = sadd.s32 %s291, 1
      %s293 = scalar_select %p290, %s291, %s292
      %p296 = pneg %p290
      %p297 = scmp.eq.s32.totalorder %s29, 3
      %p298 = por %p296, %p297
      %p299 = scmp.ne.s32.totalorder %s291, %s294
      %p300 = scmp.eq.s32.totalorder %s29, 0
      %p301 = por %p299, %p300
      %p302 = scmp.ne.s32.totalorder %s291, %s294
      %p303 = scmp.eq.s32.totalorder %s34, 3
      %p304 = por %p302, %p303
      %p305 = scmp.ne.s32.totalorder %s294, %s295
      %p306 = scmp.eq.s32.totalorder %s34, 0
      %p307 = por %p305, %p306
      %p308 = scmp.ne.s32.totalorder %s294, %s295
      %p309 = scmp.eq.s32.totalorder %s35, 3
      %p310 = por %p308, %p309
      %p312 = scmp.ne.s32.totalorder %s295, %s311
      %p313 = scmp.eq.s32.totalorder %s35, 0
      %p314 = por %p312, %p313
      %s315 = ssub.s32 %s37, %s44
      %p316 = scmp.eq.s32.totalorder %s315, 0
      %s318 = sadd.s32 %s317, 1
      %s319 = scalar_select %p316, %s317, %s318
      %p322 = pneg %p316
      %p323 = scmp.eq.s32.totalorder %s29, 3
      %p324 = por %p322, %p323
      %p325 = scmp.ne.s32.totalorder %s317, %s320
      %p326 = scmp.eq.s32.totalorder %s29, 0
      %p327 = por %p325, %p326
      %p328 = scmp.ne.s32.totalorder %s317, %s320
      %p329 = scmp.eq.s32.totalorder %s34, 3
      %p330 = por %p328, %p329
      %p331 = scmp.ne.s32.totalorder %s320, %s321
      %p332 = scmp.eq.s32.totalorder %s34, 0
      %p333 = por %p331, %p332
      %p334 = scmp.ne.s32.totalorder %s320, %s321
      %p335 = scmp.eq.s32.totalorder %s35, 3
      %p336 = por %p334, %p335
      %p338 = scmp.ne.s32.totalorder %s321, %s337
      %p339 = scmp.eq.s32.totalorder %s35, 0
      %p340 = por %p338, %p339
      %s341 = ssub.s32 %s37, %s44
      %p342 = scmp.eq.s32.totalorder %s341, 0
      %s344 = sadd.s32 %s343, 1
      %s345 = scalar_select %p342, %s343, %s344
      %p348 = pneg %p342
      %p349 = scmp.eq.s32.totalorder %s29, 3
      %p350 = por %p348, %p349
      %p351 = scmp.ne.s32.totalorder %s343, %s346
      %p352 = scmp.eq.s32.totalorder %s29, 0
      %p353 = por %p351, %p352
      %p354 = scmp.ne.s32.totalorder %s343, %s346
      %p355 = scmp.eq.s32.totalorder %s34, 3
      %p356 = por %p354, %p355
      %p357 = scmp.ne.s32.totalorder %s346, %s347
      %p358 = scmp.eq.s32.totalorder %s34, 0
      %p359 = por %p357, %p358
      %p360 = scmp.ne.s32.totalorder %s346, %s347
      %p361 = scmp.eq.s32.totalorder %s35, 3
      %p362 = por %p360, %p361
      %p364 = scmp.ne.s32.totalorder %s347, %s363
      %p365 = scmp.eq.s32.totalorder %s35, 0
      %p366 = por %p364, %p365
      %s367 = ssub.s32 %s37, %s44
      %p368 = scmp.eq.s32.totalorder %s367, 0
      %s370 = sadd.s32 %s369, 1
      %s371 = scalar_select %p368, %s369, %s370
      %p374 = pneg %p368
      %p375 = scmp.eq.s32.totalorder %s29, 3
      %p376 = por %p374, %p375
      %p377 = scmp.ne.s32.totalorder %s369, %s372
      %p378 = scmp.eq.s32.totalorder %s29, 0
      %p379 = por %p377, %p378
      %p380 = scmp.ne.s32.totalorder %s369, %s372
      %p381 = scmp.eq.s32.totalorder %s34, 3
      %p382 = por %p380, %p381
      %p383 = scmp.ne.s32.totalorder %s372, %s373
      %p384 = scmp.eq.s32.totalorder %s34, 0
      %p385 = por %p383, %p384
      %p386 = scmp.ne.s32.totalorder %s372, %s373
      %p387 = scmp.eq.s32.totalorder %s35, 3
      %p388 = por %p386, %p387
      %p390 = scmp.ne.s32.totalorder %s373, %s389
      %p391 = scmp.eq.s32.totalorder %s35, 0
      %p392 = por %p390, %p391
      %s393 = ssub.s32 %s37, %s44
      %p394 = scmp.eq.s32.totalorder %s393, 0
      %s396 = sadd.s32 %s395, 1
      %s397 = scalar_select %p394, %s395, %s396
      %p400 = pneg %p394
      %p401 = scmp.eq.s32.totalorder %s29, 3
      %p402 = por %p400, %p401
      %p403 = scmp.ne.s32.totalorder %s395, %s398
      %p404 = scmp.eq.s32.totalorder %s29, 0
      %p405 = por %p403, %p404
      %p406 = scmp.ne.s32.totalorder %s395, %s398
      %p407 = scmp.eq.s32.totalorder %s34, 3
      %p408 = por %p406, %p407
      %p409 = scmp.ne.s32.totalorder %s398, %s399
      %p410 = scmp.eq.s32.totalorder %s34, 0
      %p411 = por %p409, %p410
      %p412 = scmp.ne.s32.totalorder %s398, %s399
      %p413 = scmp.eq.s32.totalorder %s35, 3
      %p414 = por %p412, %p413
      %p416 = scmp.ne.s32.totalorder %s399, %s415
      %p417 = scmp.eq.s32.totalorder %s35, 0
      %p418 = por %p416, %p417
      %s419 = ssub.s32 %s37, %s44
      %p420 = scmp.eq.s32.totalorder %s419, 0
      %s422 = sadd.s32 %s421, 1
      %s423 = scalar_select %p420, %s421, %s422
      %p426 = pneg %p420
      %p427 = scmp.eq.s32.totalorder %s29, 3
      %p428 = por %p426, %p427
      %p429 = scmp.ne.s32.totalorder %s421, %s424
      %p430 = scmp.eq.s32.totalorder %s29, 0
      %p431 = por %p429, %p430
      %p432 = scmp.ne.s32.totalorder %s421, %s424
      %p433 = scmp.eq.s32.totalorder %s34, 3
      %p434 = por %p432, %p433
      %p435 = scmp.ne.s32.totalorder %s424, %s425
      %p436 = scmp.eq.s32.totalorder %s34, 0
      %p437 = por %p435, %p436
      %p438 = scmp.ne.s32.totalorder %s424, %s425
      %p439 = scmp.eq.s32.totalorder %s35, 3
      %p440 = por %p438, %p439
      %p442 = scmp.ne.s32.totalorder %s425, %s441
      %p443 = scmp.eq.s32.totalorder %s35, 0
      %p444 = por %p442, %p443
      %s445 = ssub.s32 %s37, %s44
      %p446 = scmp.eq.s32.totalorder %s445, 0
      %s448 = sadd.s32 %s447, 1
      %s449 = scalar_select %p446, %s447, %s448
      %p452 = pneg %p446
      %p453 = scmp.eq.s32.totalorder %s29, 3
      %p454 = por %p452, %p453
      %p455 = scmp.ne.s32.totalorder %s447, %s450
      %p456 = scmp.eq.s32.totalorder %s29, 0
      %p457 = por %p455, %p456
      %p458 = scmp.ne.s32.totalorder %s447, %s450
      %p459 = scmp.eq.s32.totalorder %s34, 3
      %p460 = por %p458, %p459
      %p461 = scmp.ne.s32.totalorder %s450, %s451
      %p462 = scmp.eq.s32.totalorder %s34, 0
      %p463 = por %p461, %p462
      %p464 = scmp.ne.s32.totalorder %s450, %s451
      %p465 = scmp.eq.s32.totalorder %s35, 3
      %p466 = por %p464, %p465
      %p468 = scmp.ne.s32.totalorder %s451, %s467
      %p469 = scmp.eq.s32.totalorder %s35, 0
      %p470 = por %p468, %p469
      %s472 = sadd.s32 %s471, 1
      %p475 = scmp.eq.s32.totalorder %s29, 3
      %p476 = scmp.ne.s32.totalorder %s471, %s473
      %p477 = scmp.eq.s32.totalorder %s29, 0
      %p478 = por %p476, %p477
      %p479 = scmp.ne.s32.totalorder %s471, %s473
      %p480 = scmp.eq.s32.totalorder %s34, 3
      %p481 = por %p479, %p480
      %p482 = scmp.ne.s32.totalorder %s473, %s474
      %p483 = scmp.eq.s32.totalorder %s34, 0
      %p484 = por %p482, %p483
      %p485 = scmp.ne.s32.totalorder %s473, %s474
      %p486 = scmp.eq.s32.totalorder %s35, 3
      %p487 = por %p485, %p486
      %p489 = scmp.ne.s32.totalorder %s474, %s488
      %p490 = scmp.eq.s32.totalorder %s35, 0
      %p491 = por %p489, %p490
      %s493 = sadd.s32 %s492, 1
      %p496 = scmp.eq.s32.totalorder %s29, 3
      %p497 = scmp.ne.s32.totalorder %s492, %s494
      %p498 = scmp.eq.s32.totalorder %s29, 0
      %p499 = por %p497, %p498
      %p500 = scmp.ne.s32.totalorder %s492, %s494
      %p501 = scmp.eq.s32.totalorder %s34, 3
      %p502 = por %p500, %p501
      %p503 = scmp.ne.s32.totalorder %s494, %s495
      %p504 = scmp.eq.s32.totalorder %s34, 0
      %p505 = por %p503, %p504
      %p506 = scmp.ne.s32.totalorder %s494, %s495
      %p507 = scmp.eq.s32.totalorder %s35, 3
      %p508 = por %p506, %p507
      %p510 = scmp.ne.s32.totalorder %s495, %s509
      %p511 = scmp.eq.s32.totalorder %s35, 0
      %p512 = por %p510, %p511
      %s514 = sadd.s32 %s513, 1
      %p517 = scmp.eq.s32.totalorder %s29, 3
      %p518 = scmp.ne.s32.totalorder %s513, %s515
      %p519 = scmp.eq.s32.totalorder %s29, 0
      %p520 = por %p518, %p519
      %p521 = scmp.ne.s32.totalorder %s513, %s515
      %p522 = scmp.eq.s32.totalorder %s34, 3
      %p523 = por %p521, %p522
      %p524 = scmp.ne.s32.totalorder %s515, %s516
      %p525 = scmp.eq.s32.totalorder %s34, 0
      %p526 = por %p524, %p525
      %p527 = scmp.ne.s32.totalorder %s515, %s516
      %p528 = scmp.eq.s32.totalorder %s35, 3
      %p529 = por %p527, %p528
      %p531 = scmp.ne.s32.totalorder %s516, %s530
      %p532 = scmp.eq.s32.totalorder %s35, 0
      %p533 = por %p531, %p532
      %s534 = ssub.s32 %s36, %s48
      %p535 = scmp.eq.s32.totalorder %s534, 0
      %s537 = sadd.s32 %s536, 1
      %s538 = scalar_select %p535, %s536, %s537
      %p541 = pneg %p535
      %p542 = scmp.eq.s32.totalorder %s29, 3
      %p543 = por %p541, %p542
      %p544 = scmp.ne.s32.totalorder %s536, %s539
      %p545 = scmp.eq.s32.totalorder %s29, 0
      %p546 = por %p544, %p545
      %p547 = scmp.ne.s32.totalorder %s536, %s539
      %p548 = scmp.eq.s32.totalorder %s34, 3
      %p549 = por %p547, %p548
      %p550 = scmp.ne.s32.totalorder %s539, %s540
      %p551 = scmp.eq.s32.totalorder %s34, 0
      %p552 = por %p550, %p551
      %p553 = scmp.ne.s32.totalorder %s539, %s540
      %p554 = scmp.eq.s32.totalorder %s35, 3
      %p555 = por %p553, %p554
      %p557 = scmp.ne.s32.totalorder %s540, %s556
      %p558 = scmp.eq.s32.totalorder %s35, 0
      %p559 = por %p557, %p558
      %p560 = scmp.le.s32.totalorder 1, %s29
      %p561 = scmp.lt.s32.totalorder %s29, 5
      %p562 = pnand %p560, %p561
      %p563 = pneg %p562
      // Predicated region
      $region9: #{tpu_custom_call.1} parent=5 // pred_check
        _
      $region10: #{tpu_custom_call.1} parent=5 // pred_check_branch
        %565 = sbr.rel (%p562) target = $region12
      $region11: #{tpu_custom_call.1} parent=5 // pred_region
        %s566 = ssub.s32 %s29, 1
        // Predicated region
        $region13: #{tpu_custom_call.1} parent=11 // pred_check
          %p567 = pneg %p88
        $region14: #{tpu_custom_call.1} parent=11 // pred_check_branch
          %569 = sbr.rel (%p567) target = $region16
        $region15: #{tpu_custom_call.1} parent=11 // pred_region
          _
        $region16: #{tpu_custom_call.1} parent=11 // pred_fallthru
          _
        // Predicated region
        $region17: #{tpu_custom_call.1} parent=11 // pred_check
          %p570 = pneg %p109
        $region18: #{tpu_custom_call.1} parent=11 // pred_check_branch
          %572 = sbr.rel (%p570) target = $region20
        $region19: #{tpu_custom_call.1} parent=11 // pred_region
          _
        $region20: #{tpu_custom_call.1} parent=11 // pred_fallthru
          _
        // Predicated region
        $region21: #{tpu_custom_call.1} parent=11 // pred_check
          %p573 = pneg %p130
        $region22: #{tpu_custom_call.1} parent=11 // pred_check_branch
          %575 = sbr.rel (%p573) target = $region24
        $region23: #{tpu_custom_call.1} parent=11 // pred_region
          _
        $region24: #{tpu_custom_call.1} parent=11 // pred_fallthru
          _
        // Predicated region
        $region25: #{tpu_custom_call.1} parent=11 // pred_check
          %p576 = pneg %p151
        $region26: #{tpu_custom_call.1} parent=11 // pred_check_branch
          %578 = sbr.rel (%p576) target = $region28
        $region27: #{tpu_custom_call.1} parent=11 // pred_region
          _
        $region28: #{tpu_custom_call.1} parent=11 // pred_fallthru
          _
        // Predicated region
        $region29: #{tpu_custom_call.1} parent=11 // pred_check
          %p579 = pneg %p484
        $region30: #{tpu_custom_call.1} parent=11 // pred_check_branch
          %581 = sbr.rel (%p579) target = $region32
        $region31: #{tpu_custom_call.1} parent=11 // pred_region
          _
        $region32: #{tpu_custom_call.1} parent=11 // pred_fallthru
          _
        // Predicated region
        $region33: #{tpu_custom_call.1} parent=11 // pred_check
          %p582 = pneg %p505
        $region34: #{tpu_custom_call.1} parent=11 // pred_check_branch
          %584 = sbr.rel (%p582) target = $region36
        $region35: #{tpu_custom_call.1} parent=11 // pred_region
          _
        $region36: #{tpu_custom_call.1} parent=11 // pred_fallthru
          _
        // Predicated region
        $region37: #{tpu_custom_call.1} parent=11 // pred_check
          %p585 = pneg %p526
        $region38: #{tpu_custom_call.1} parent=11 // pred_check_branch
          %587 = sbr.rel (%p585) target = $region40
        $region39: #{tpu_custom_call.1} parent=11 // pred_region
          _
        $region40: #{tpu_custom_call.1} parent=11 // pred_fallthru
          _
      $region12: #{tpu_custom_call.1} parent=5 // pred_fallthru
        _
      %p588 = scmp.lt.s32.totalorder %s29, 4
      // Predicated region
      $region41: #{tpu_custom_call.1} parent=5 // pred_check
        %p589 = pneg %p588
      $region42: #{tpu_custom_call.1} parent=5 // pred_check_branch
        %591 = sbr.rel (%p589) target = $region44
      $region43: #{tpu_custom_call.1} parent=5 // pred_region
        // Predicated region
        $region45: #{tpu_custom_call.1} parent=43 // pred_check
          %p592 = pneg %p61
        $region46: #{tpu_custom_call.1} parent=43 // pred_check_branch
          %594 = sbr.rel (%p592) target = $region48
        $region47: #{tpu_custom_call.1} parent=43 // pred_region
          %p595 = scmp.lt.s32.totalorder %s36, 1
          %s596 = scalar_select %p595, %s36, 1
          %s597 = smul.addr %s596, 2
          %s598 = smul.addr %s597, 8
          %s599 = scalar_lea.vmem %s0, %s598
        $region48: #{tpu_custom_call.1} parent=43 // pred_fallthru
          _
        // Predicated region
        $region49: #{tpu_custom_call.1} parent=43 // pred_check
          %p600 = pneg %p171
        $region50: #{tpu_custom_call.1} parent=43 // pred_check_branch
          %602 = sbr.rel (%p600) target = $region52
        $region51: #{tpu_custom_call.1} parent=43 // pred_region
          %p603 = scmp.lt.s32.totalorder %s37, 1
          %s604 = scalar_select %p603, %s37, 1
          %s605 = smul.addr %s604, 4
          %s606 = smul.addr %s605, 4
          %s607 = scalar_lea.vmem %s5, %s606
        $region52: #{tpu_custom_call.1} parent=43 // pred_fallthru
          _
        // Predicated region
        $region53: #{tpu_custom_call.1} parent=43 // pred_check
          %p608 = pneg %p197
        $region54: #{tpu_custom_call.1} parent=43 // pred_check_branch
          %610 = sbr.rel (%p608) target = $region56
        $region55: #{tpu_custom_call.1} parent=43 // pred_region
          %p611 = scmp.lt.s32.totalorder %s37, 1
          %s612 = scalar_select %p611, %s37, 1
          %s613 = scalar_lea.vmem %s6, %s612
        $region56: #{tpu_custom_call.1} parent=43 // pred_fallthru
          _
        // Predicated region
        $region57: #{tpu_custom_call.1} parent=43 // pred_check
          %p614 = pneg %p223
        $region58: #{tpu_custom_call.1} parent=43 // pred_check_branch
          %616 = sbr.rel (%p614) target = $region60
        $region59: #{tpu_custom_call.1} parent=43 // pred_region
          %p617 = scmp.lt.s32.totalorder %s37, 1
          %s618 = scalar_select %p617, %s37, 1
          %s619 = smul.addr %s618, 4
          %s620 = smul.addr %s619, 4
          %s621 = scalar_lea.vmem %s7, %s620
        $region60: #{tpu_custom_call.1} parent=43 // pred_fallthru
          _
        // Predicated region
        $region61: #{tpu_custom_call.1} parent=43 // pred_check
          %p622 = pneg %p249
        $region62: #{tpu_custom_call.1} parent=43 // pred_check_branch
          %624 = sbr.rel (%p622) target = $region64
        $region63: #{tpu_custom_call.1} parent=43 // pred_region
          %p625 = scmp.lt.s32.totalorder %s37, 1
          %s626 = scalar_select %p625, %s37, 1
          %s627 = scalar_lea.vmem %s8, %s626
        $region64: #{tpu_custom_call.1} parent=43 // pred_fallthru
          _
        // Predicated region
        $region65: #{tpu_custom_call.1} parent=43 // pred_check
          %p628 = pneg %p275
        $region66: #{tpu_custom_call.1} parent=43 // pred_check_branch
          %630 = sbr.rel (%p628) target = $region68
        $region67: #{tpu_custom_call.1} parent=43 // pred_region
          %p631 = scmp.lt.s32.totalorder %s37, 1
          %s632 = scalar_select %p631, %s37, 1
          %s633 = scalar_lea.vmem %s9, %s632
        $region68: #{tpu_custom_call.1} parent=43 // pred_fallthru
          _
        // Predicated region
        $region69: #{tpu_custom_call.1} parent=43 // pred_check
          %p634 = pneg %p301
        $region70: #{tpu_custom_call.1} parent=43 // pred_check_branch
          %636 = sbr.rel (%p634) target = $region72
        $region71: #{tpu_custom_call.1} parent=43 // pred_region
          %p637 = scmp.lt.s32.totalorder %s37, 1
          %s638 = scalar_select %p637, %s37, 1
          %s639 = scalar_lea.vmem %s10, %s638
        $region72: #{tpu_custom_call.1} parent=43 // pred_fallthru
          _
        // Predicated region
        $region73: #{tpu_custom_call.1} parent=43 // pred_check
          %p640 = pneg %p327
        $region74: #{tpu_custom_call.1} parent=43 // pred_check_branch
          %642 = sbr.rel (%p640) target = $region76
        $region75: #{tpu_custom_call.1} parent=43 // pred_region
          %p643 = scmp.lt.s32.totalorder %s37, 1
          %s644 = scalar_select %p643, %s37, 1
          %s645 = scalar_lea.vmem %s11, %s644
        $region76: #{tpu_custom_call.1} parent=43 // pred_fallthru
          _
        // Predicated region
        $region77: #{tpu_custom_call.1} parent=43 // pred_check
          %p646 = pneg %p353
        $region78: #{tpu_custom_call.1} parent=43 // pred_check_branch
          %648 = sbr.rel (%p646) target = $region80
        $region79: #{tpu_custom_call.1} parent=43 // pred_region
          %p649 = scmp.lt.s32.totalorder %s37, 1
          %s650 = scalar_select %p649, %s37, 1
          %s651 = scalar_lea.vmem %s12, %s650
        $region80: #{tpu_custom_call.1} parent=43 // pred_fallthru
          _
        // Predicated region
        $region81: #{tpu_custom_call.1} parent=43 // pred_check
          %p652 = pneg %p379
        $region82: #{tpu_custom_call.1} parent=43 // pred_check_branch
          %654 = sbr.rel (%p652) target = $region84
        $region83: #{tpu_custom_call.1} parent=43 // pred_region
          %p655 = scmp.lt.s32.totalorder %s37, 1
          %s656 = scalar_select %p655, %s37, 1
          %s657 = smul.addr %s656, 4
          %s658 = smul.addr %s657, 4
          %s659 = scalar_lea.vmem %s13, %s658
        $region84: #{tpu_custom_call.1} parent=43 // pred_fallthru
          _
        // Predicated region
        $region85: #{tpu_custom_call.1} parent=43 // pred_check
          %p660 = pneg %p405
        $region86: #{tpu_custom_call.1} parent=43 // pred_check_branch
          %662 = sbr.rel (%p660) target = $region88
        $region87: #{tpu_custom_call.1} parent=43 // pred_region
          %p663 = scmp.lt.s32.totalorder %s37, 1
          %s664 = scalar_select %p663, %s37, 1
          %s665 = scalar_lea.vmem %s14, %s664
        $region88: #{tpu_custom_call.1} parent=43 // pred_fallthru
          _
        // Predicated region
        $region89: #{tpu_custom_call.1} parent=43 // pred_check
          %p666 = pneg %p431
        $region90: #{tpu_custom_call.1} parent=43 // pred_check_branch
          %668 = sbr.rel (%p666) target = $region92
        $region91: #{tpu_custom_call.1} parent=43 // pred_region
          %p669 = scmp.lt.s32.totalorder %s37, 1
          %s670 = scalar_select %p669, %s37, 1
          %s671 = smul.addr %s670, 16
          %s672 = smul.addr %s671, 4
          %s673 = scalar_lea.vmem %s15, %s672
        $region92: #{tpu_custom_call.1} parent=43 // pred_fallthru
          _
        // Predicated region
        $region93: #{tpu_custom_call.1} parent=43 // pred_check
          %p674 = pneg %p457
        $region94: #{tpu_custom_call.1} parent=43 // pred_check_branch
          %676 = sbr.rel (%p674) target = $region96
        $region95: #{tpu_custom_call.1} parent=43 // pred_region
          %p677 = scmp.lt.s32.totalorder %s37, 1
          %s678 = scalar_select %p677, %s37, 1
          %s679 = scalar_lea.vmem %s16, %s678
        $region96: #{tpu_custom_call.1} parent=43 // pred_fallthru
          _
      $region44: #{tpu_custom_call.1} parent=5 // pred_fallthru
        _
      %p680 = scmp.le.s32.totalorder 1, %s29
      %p681 = scmp.lt.s32.totalorder %s29, 5
      %p682 = pnand %p680, %p681
      %p683 = pneg %p682
      // Predicated region
      $region97: #{tpu_custom_call.1} parent=5 // pred_check
        _
      $region98: #{tpu_custom_call.1} parent=5 // pred_check_branch
        %685 = sbr.rel (%p682) target = $region100
      $region99: #{tpu_custom_call.1} parent=5 // pred_region
        %s686 = ssub.s32 %s29, 1
        %p687 = scmp.lt.s32.totalorder %s38, 1
        %s688 = scalar_select %p687, %s38, 1
        %s689 = smul.addr %s688, 2
        %s690 = smul.addr %s689, 8
        %s691 = scalar_lea.vmem %s0, %s690
        %p692 = pneg %p67
        %p693 = pneg %p64
        %p694 = pneg %p88
        %p695 = pneg %p85
        %p696 = pneg %p109
        %p697 = pneg %p106
        %p698 = pneg %p130
        %p699 = pneg %p127
        %p700 = pneg %p151
        %p701 = pneg %p148
        %p702 = scmp.lt.s32.totalorder %s39, 1
        %s703 = scalar_select %p702, %s39, 1
        %s704 = smul.addr %s703, 4
        %s705 = smul.addr %s704, 4
        %s706 = scalar_lea.vmem %s5, %s705
        %p707 = pneg %p177
        %p708 = pneg %p174
        %p709 = scmp.lt.s32.totalorder %s39, 1
        %s710 = scalar_select %p709, %s39, 1
        %s711 = scalar_lea.vmem %s6, %s710
        %p712 = pneg %p203
        %p713 = pneg %p200
        %p714 = scmp.lt.s32.totalorder %s39, 1
        %s715 = scalar_select %p714, %s39, 1
        %s716 = smul.addr %s715, 4
        %s717 = smul.addr %s716, 4
        %s718 = scalar_lea.vmem %s7, %s717
        %p719 = pneg %p229
        %p720 = pneg %p226
        %p721 = scmp.lt.s32.totalorder %s39, 1
        %s722 = scalar_select %p721, %s39, 1
        %s723 = scalar_lea.vmem %s8, %s722
        %p724 = pneg %p255
        %p725 = pneg %p252
        %p726 = scmp.lt.s32.totalorder %s39, 1
        %s727 = scalar_select %p726, %s39, 1
        %s728 = scalar_lea.vmem %s9, %s727
        %p729 = pneg %p281
        %p730 = pneg %p278
        %p731 = scmp.lt.s32.totalorder %s39, 1
        %s732 = scalar_select %p731, %s39, 1
        %s733 = scalar_lea.vmem %s10, %s732
        %p734 = pneg %p307
        %p735 = pneg %p304
        %p736 = scmp.lt.s32.totalorder %s39, 1
        %s737 = scalar_select %p736, %s39, 1
        %s738 = scalar_lea.vmem %s11, %s737
        %p739 = pneg %p333
        %p740 = pneg %p330
        %p741 = scmp.lt.s32.totalorder %s39, 1
        %s742 = scalar_select %p741, %s39, 1
        %s743 = scalar_lea.vmem %s12, %s742
        %p744 = pneg %p359
        %p745 = pneg %p356
        %p746 = scmp.lt.s32.totalorder %s39, 1
        %s747 = scalar_select %p746, %s39, 1
        %s748 = smul.addr %s747, 4
        %s749 = smul.addr %s748, 4
        %s750 = scalar_lea.vmem %s13, %s749
        %p751 = pneg %p385
        %p752 = pneg %p382
        %p753 = scmp.lt.s32.totalorder %s39, 1
        %s754 = scalar_select %p753, %s39, 1
        %s755 = scalar_lea.vmem %s14, %s754
        %p756 = pneg %p411
        %p757 = pneg %p408
        %p758 = scmp.lt.s32.totalorder %s39, 1
        %s759 = scalar_select %p758, %s39, 1
        %s760 = smul.addr %s759, 16
        %s761 = smul.addr %s760, 4
        %s762 = scalar_lea.vmem %s15, %s761
        %p763 = pneg %p437
        %p764 = pneg %p434
        %p765 = scmp.lt.s32.totalorder %s39, 1
        %s766 = scalar_select %p765, %s39, 1
        %s767 = scalar_lea.vmem %s16, %s766
        %p768 = pneg %p463
        %p769 = pneg %p460
        %p770 = pneg %p484
        %p771 = pneg %p481
        %p772 = pneg %p505
        %p773 = pneg %p502
        %p774 = pneg %p526
        %p775 = pneg %p523
        %p776 = pneg %p552
        %p777 = pneg %p549
        %s778 = sand.u32 %s539, 1
        %s779 = scalar_lea.sflag [#allocation4], %s778
        %s780 = sand.u32 %s539, 1
        %s781 = scalar_lea.vmem [#allocation3], %s780
        %p782 = scmp.lt.s32.totalorder %s38, 1
        %s783 = scalar_select %p782, %s38, 1
        %s784 = smul.addr %s783, 2
        %s785 = smul.addr %s784, 8
        %s786 = scalar_lea.vmem %s0, %s785
        %p787 = scmp.lt.s32.totalorder %s39, 1
        %s788 = scalar_select %p787, %s39, 1
        %s789 = smul.addr %s788, 4
        %s790 = smul.addr %s789, 4
        %s791 = scalar_lea.vmem %s5, %s790
        %p792 = scmp.lt.s32.totalorder %s39, 1
        %s793 = scalar_select %p792, %s39, 1
        %s794 = scalar_lea.vmem %s6, %s793
        %p795 = scmp.lt.s32.totalorder %s39, 1
        %s796 = scalar_select %p795, %s39, 1
        %s797 = smul.addr %s796, 4
        %s798 = smul.addr %s797, 4
        %s799 = scalar_lea.vmem %s7, %s798
        %p800 = scmp.lt.s32.totalorder %s39, 1
        %s801 = scalar_select %p800, %s39, 1
        %s802 = scalar_lea.vmem %s8, %s801
        %p803 = scmp.lt.s32.totalorder %s39, 1
        %s804 = scalar_select %p803, %s39, 1
        %s805 = scalar_lea.vmem %s9, %s804
        %p806 = scmp.lt.s32.totalorder %s39, 1
        %s807 = scalar_select %p806, %s39, 1
        %s808 = scalar_lea.vmem %s10, %s807
        %p809 = scmp.lt.s32.totalorder %s39, 1
        %s810 = scalar_select %p809, %s39, 1
        %s811 = scalar_lea.vmem %s11, %s810
        %p812 = scmp.lt.s32.totalorder %s39, 1
        %s813 = scalar_select %p812, %s39, 1
        %s814 = scalar_lea.vmem %s12, %s813
        %p815 = scmp.lt.s32.totalorder %s39, 1
        %s816 = scalar_select %p815, %s39, 1
        %s817 = smul.addr %s816, 4
        %s818 = smul.addr %s817, 4
        %s819 = scalar_lea.vmem %s13, %s818
        %p820 = scmp.lt.s32.totalorder %s39, 1
        %s821 = scalar_select %p820, %s39, 1
        %s822 = scalar_lea.vmem %s14, %s821
        %p823 = scmp.lt.s32.totalorder %s39, 1
        %s824 = scalar_select %p823, %s39, 1
        %s825 = smul.addr %s824, 16
        %s826 = smul.addr %s825, 4
        %s827 = scalar_lea.vmem %s15, %s826
        %p828 = scmp.lt.s32.totalorder %s39, 1
        %s829 = scalar_select %p828, %s39, 1
        %s830 = scalar_lea.vmem %s16, %s829
        %p832 = scmp.eq.s32.totalorder %s39, 0
        // Predicated region
        $region101: #{tpu_custom_call.1} parent=99 // pred_check
          %p833 = pneg %p832
        $region102: #{tpu_custom_call.1} parent=99 // pred_check_branch
          %835 = sbr.rel (%p833) target = $region104
        $region103: #{tpu_custom_call.1} parent=99 // pred_region
          %v836 = vld [vmem:[%s786] sm:$0x1f]
          %v837 = vld [vmem:[%s786 + $0x8] sm:$0x1f]
          %v838 = vpack.c.bf16 %v836, %v836
          %v839 = vpack.c.bf16 %v837, %v837
          %v840 = vld [vmem:[%s1] sm:$0xf]
          %v841 = vld [vmem:[%s1 + $0x4] sm:$0xf]
          %v842 = vld [vmem:[%s1 + $0x8] sm:$0xf]
          %v843 = vld [vmem:[%s1 + $0xc] sm:$0xf]
          %v844 = vld [vmem:[%s1 + $0x10] sm:$0xf]
          %v845 = vld [vmem:[%s1 + $0x14] sm:$0xf]
          %v846 = vld [vmem:[%s1 + $0x18] sm:$0xf]
          %v847 = vld [vmem:[%s1 + $0x1c] sm:$0xf]
          %v848 = vld [vmem:[%s1 + $0x20] sm:$0xf]
          %v849 = vld [vmem:[%s1 + $0x24] sm:$0xf]
          %v850 = vld [vmem:[%s1 + $0x28] sm:$0xf]
          %v851 = vld [vmem:[%s1 + $0x2c] sm:$0xf]
          %v852 = vld [vmem:[%s1 + $0x30] sm:$0xf]
          %v853 = vld [vmem:[%s1 + $0x34] sm:$0xf]
          %v854 = vld [vmem:[%s1 + $0x38] sm:$0xf]
          %v855 = vld [vmem:[%s1 + $0x3c] sm:$0xf]
          %v856 = vld [vmem:[%s1 + $0x40] sm:$0xf]
          %v857 = vld [vmem:[%s1 + $0x44] sm:$0xf]
          %v858 = vld [vmem:[%s1 + $0x48] sm:$0xf]
          %v859 = vld [vmem:[%s1 + $0x4c] sm:$0xf]
          %v860 = vld [vmem:[%s1 + $0x50] sm:$0xf]
          %v861 = vld [vmem:[%s1 + $0x54] sm:$0xf]
          %v862 = vld [vmem:[%s1 + $0x58] sm:$0xf]
          %v863 = vld [vmem:[%s1 + $0x5c] sm:$0xf]
          %v864 = vld [vmem:[%s2] sm:$0x1f]
          %v889 = vunpack.c.l.b16 %v840
          %v890 = vunpack.c.l.b16 %v841
          %v891 = vunpack.c.l.b16 %v842
          %v892 = vunpack.c.l.b16 %v843
          %v893 = vunpack.c.l.b16 %v844
          %v894 = vunpack.c.l.b16 %v845
          %v895 = vunpack.c.l.b16 %v846
          %v896 = vunpack.c.l.b16 %v847
          %v897 = vunpack.c.l.b16 %v848
          %v898 = vunpack.c.l.b16 %v849
          %v899 = vunpack.c.l.b16 %v850
          %v900 = vunpack.c.l.b16 %v851
          %v901 = vunpack.c.l.b16 %v852
          %v902 = vunpack.c.l.b16 %v853
          %v903 = vunpack.c.l.b16 %v854
          %v904 = vunpack.c.l.b16 %v855
          %v905 = vunpack.c.l.b16 %v856
          %v906 = vunpack.c.l.b16 %v857
          %v907 = vunpack.c.l.b16 %v858
          %v908 = vunpack.c.l.b16 %v859
          %v909 = vunpack.c.l.b16 %v860
          %v910 = vunpack.c.l.b16 %v861
          %v911 = vunpack.c.l.b16 %v862
          %v912 = vunpack.c.l.b16 %v863
          %v913 = vpack.c.b16 %v890, %v889
          %v914 = vpack.c.b16 %v892, %v891
          %v915 = vpack.c.b16 %v894, %v893
          %v916 = vpack.c.b16 %v896, %v895
          %v917 = vpack.c.b16 %v898, %v897
          %v918 = vpack.c.b16 %v900, %v899
          %v919 = vpack.c.b16 %v902, %v901
          %v920 = vpack.c.b16 %v904, %v903
          %v921 = vpack.c.b16 %v906, %v905
          %v922 = vpack.c.b16 %v908, %v907
          %v923 = vpack.c.b16 %v910, %v909
          %v924 = vpack.c.b16 %v912, %v911
          %vm937 = vcmask 523264
          %v939 = vsel %vm937, %v839, 0
          %941 = vmatprep.subr.bf16.mxu0 0
          %942 = vmatpush1.bf16.msra.mxu0 %v920
          %943 = vmatprep.subr.bf16.mxu0 0
          %944 = vmatpush1.bf16.msra.mxu0 %v919
          %945 = vmatprep.subr.bf16.mxu0 0
          %946 = vmatpush1.bf16.msra.mxu0 %v918
          %947 = vmatprep.subr.bf16.mxu0 0
          %948 = vmatpush1.bf16.msra.mxu0 %v917
          %949 = vmatprep.subr.bf16.mxu0 0
          %950 = vmatpush1.bf16.msra.mxu0 %v916
          %951 = vmatprep.subr.bf16.mxu0 0
          %952 = vmatpush1.bf16.msra.mxu0 %v915
          %953 = vmatprep.subr.bf16.mxu0 0
          %954 = vmatpush1.bf16.msra.mxu0 %v914
          %955 = vmatprep.subr.bf16.mxu0 0
          %956 = vmatpush1.bf16.msra.mxu0 %v913
          %957 = vmatprep.subr.bf16.mxu0 0
          %958 = vmatpush2.bf16.msra.mxu0 0
          %959 = vmatprep.subr.bf16.mxu0 0
          %960 = vmatpush2.bf16.msra.mxu0 0
          %961 = vmatprep.subr.bf16.mxu0 0
          %962 = vmatpush2.bf16.msra.mxu0 0
          %963 = vmatprep.subr.bf16.mxu0 0
          %964 = vmatpush2.bf16.msra.mxu0 0
          %965 = vmatprep.subr.bf16.mxu0 0
          %966 = vmatpush2.bf16.msra.mxu0 %v924
          %967 = vmatprep.subr.bf16.mxu0 0
          %968 = vmatpush2.bf16.msra.mxu0 %v923
          %969 = vmatprep.subr.bf16.mxu0 0
          %970 = vmatpush2.bf16.msra.mxu0 %v922
          %971 = vmatprep.subr.bf16.mxu0 0
          %972 = vmatpush2.bf16.msra.mxu0 %v921
          %973 = vmatprep.mubr.bf16.mxu0 %v939
          %974 = vmatmul.mubr.bf16.gmra.mxu0 %v838
          %v975 = vpop.f32.mrf.mxu0
          %v976 = vadd.f32 %v864, %v975
          %v977 = vpop.f32.mrf.mxu0
          %v978 = vpop.f32.mrf.mxu0
          %v979 = vpop.f32.mrf.mxu0
          %980 = vdwg.mxu0
          %v981 = vld [vmem:[%s3] sm:$0x1]
          %v982 = vld [vmem:[%s4] sm:$0x1]
          %vm983 = vcmask 258048
          %v984 = vsel %vm983, %v976, 0.0
          %985 = vadd.xlane.f32.xlu0 %v984
          %v986 = vpop.xlane.xlu0 %985
          %v987 = vrcp.pop 32.0
          %v988 = vmul.f32 %v986, %v987
          %v989 = vsub.f32 %v976, %v988
          %v990 = vmul.f32 %v989, %v989
          %v991 = vsel %vm983, %v990, 0.0
          %992 = vadd.xlane.f32.xlu0 %v991
          %v993 = vpop.xlane.xlu0 %992
          %v994 = vmul.f32 %v993, %v987
          %v995 = vadd.f32 %v994, 1e-05
          %v996 = vrsqrt.pop %v995
          %v997 = vmul.f32 %v989, %v996
          %v999 = vlaneseq
          %v1000 = vshrl.u32 %v999, 7
          %v1001 = vsub.s32 0, %v1000
          %v1002 = vrot.slane %v981, %v1001
          %v1004 = vmul.f32 %v997, %v1002
          %v1006 = vlaneseq
          %v1007 = vshrl.u32 %v1006, 7
          %v1008 = vsub.s32 0, %v1007
          %v1009 = vrot.slane %v982, %v1008
          %v1011 = vadd.f32 %v1004, %v1009
          %1012 = vst.msk [vmem:[#allocation2] sm:$0x1f] %vm983, %v1011
        $region104: #{tpu_custom_call.1} parent=99 // pred_fallthru
          _
        %v1013 = vld [vmem:[#allocation2] sm:$0x1f]
        %v1014 = vld [vmem:[%s805] sm:$0x1]
        %v1015 = vld [vmem:[%s808] sm:$0x1]
        %vm1016 = vcmask 258048
        %v1017 = vsel %vm1016, %v1013, 0.0
        %1018 = vadd.xlane.f32.xlu0 %v1017
        %v1019 = vpop.xlane.xlu0 %1018
        %v1020 = vrcp.pop 32.0
        %v1021 = vmul.f32 %v1019, %v1020
        %v1022 = vsub.f32 %v1013, %v1021
        %v1023 = vmul.f32 %v1022, %v1022
        %v1024 = vsel %vm1016, %v1023, 0.0
        %1025 = vadd.xlane.f32.xlu0 %v1024
        %v1026 = vpop.xlane.xlu0 %1025
        %v1027 = vmul.f32 %v1026, %v1020
        %v1028 = vadd.f32 %v1027, 1e-05
        %v1029 = vrsqrt.pop %v1028
        %v1030 = vmul.f32 %v1022, %v1029
        %v1032 = vlaneseq
        %v1033 = vshrl.u32 %v1032, 7
        %v1034 = vsub.s32 0, %v1033
        %v1035 = vrot.slane %v1014, %v1034
        %v1037 = vmul.f32 %v1030, %v1035
        %v1039 = vlaneseq
        %v1040 = vshrl.u32 %v1039, 7
        %v1041 = vsub.s32 0, %v1040
        %v1042 = vrot.slane %v1015, %v1041
        %v1044 = vadd.f32 %v1037, %v1042
        %v1045 = vpack.c.bf16 %v1044, %v1044
        %v1046 = vld [vmem:[%s791] sm:$0xf]
        %v1047 = vld [vmem:[%s791 + $0x4] sm:$0xf]
        %v1048 = vld [vmem:[%s791 + $0x8] sm:$0xf]
        %v1049 = vld [vmem:[%s791 + $0xc] sm:$0xf]
        %v1050 = vld [vmem:[%s794] sm:$0x1]
        %v1052 = vlaneseq
        %v1053 = vshrl.u32 %v1052, 7
        %v1054 = vsub.s32 0, %v1053
        %v1055 = vrot.slane %v1050, %v1054
        %v1061 = vunpack.c.l.b16 %v1046
        %v1062 = vunpack.c.l.b16 %v1047
        %v1063 = vunpack.c.l.b16 %v1048
        %v1064 = vunpack.c.l.b16 %v1049
        %v1065 = vpack.c.b16 %v1062, %v1061
        %v1066 = vpack.c.b16 %v1064, %v1063
        %vm1069 = vcmask 261120
        %v1071 = vsel %vm1069, %v1045, 0
        %1073 = vmatprep.subr.bf16.mxu0 0
        %1074 = vmatpush1.bf16.msra.mxu0 0
        %1075 = vmatprep.subr.bf16.mxu0 0
        %1076 = vmatpush1.bf16.msra.mxu0 0
        %1077 = vmatprep.subr.bf16.mxu0 0
        %1078 = vmatpush1.bf16.msra.mxu0 0
        %1079 = vmatprep.subr.bf16.mxu0 0
        %1080 = vmatpush1.bf16.msra.mxu0 0
        %1081 = vmatprep.subr.bf16.mxu0 0
        %1082 = vmatpush1.bf16.msra.mxu0 0
        %1083 = vmatprep.subr.bf16.mxu0 0
        %1084 = vmatpush1.bf16.msra.mxu0 0
        %1085 = vmatprep.subr.bf16.mxu0 0
        %1086 = vmatpush1.bf16.msra.mxu0 %v1066
        %1087 = vmatprep.subr.bf16.mxu0 0
        %1088 = vmatpush1.bf16.msra.mxu0 %v1065
        %1089 = vmatprep.subr.bf16.mxu0 0
        %1090 = vmatpush2.bf16.msra.mxu0 0
        %1091 = vmatprep.subr.bf16.mxu0 0
        %1092 = vmatpush2.bf16.msra.mxu0 0
        %1093 = vmatprep.subr.bf16.mxu0 0
        %1094 = vmatpush2.bf16.msra.mxu0 0
        %1095 = vmatprep.subr.bf16.mxu0 0
        %1096 = vmatpush2.bf16.msra.mxu0 0
        %1097 = vmatprep.subr.bf16.mxu0 0
        %1098 = vmatpush2.bf16.msra.mxu0 0
        %1099 = vmatprep.subr.bf16.mxu0 0
        %1100 = vmatpush2.bf16.msra.mxu0 0
        %1101 = vmatprep.subr.bf16.mxu0 0
        %1102 = vmatpush2.bf16.msra.mxu0 0
        %1103 = vmatprep.subr.bf16.mxu0 0
        %1104 = vmatpush2.bf16.msra.mxu0 0
        %1105 = vmatprep.mubr.bf16.mxu0 0
        %1106 = vmatmul.mubr.bf16.gmra.mxu0 %v1071
        %v1107 = vpop.f32.mrf.mxu0
        %v1108 = vadd.f32 %v1055, %v1107
        %v1109 = vpop.f32.mrf.mxu0
        %v1110 = vpop.f32.mrf.mxu0
        %v1111 = vpop.f32.mrf.mxu0
        %1112 = vdwg.mxu0
        %v1113 = vpack.c.bf16 %v1108, %v1108
        %1115 = vrot.lane.b32.xlu0 %v1113, 96
        %v1116 = vpop.permute.xlu0 %1115
        %vm1117 = vcmask 64512
        %v1119 = vsel %vm1117, %v1113, 0
        %v1122 = vsel %vm1117, %v1116, 0
        %1124 = vmatprep.subr.bf16.mxu0 0
        %1125 = vmatpush1.bf16.xpose.msra.mxu0 0
        %1126 = vmatprep.subr.bf16.mxu0 0
        %1127 = vmatpush1.bf16.xpose.msra.mxu0 0
        %1128 = vmatprep.subr.bf16.mxu0 0
        %1129 = vmatpush1.bf16.xpose.msra.mxu0 0
        %1130 = vmatprep.subr.bf16.mxu0 0
        %1131 = vmatpush1.bf16.xpose.msra.mxu0 0
        %1132 = vmatprep.subr.bf16.mxu0 0
        %1133 = vmatpush1.bf16.xpose.msra.mxu0 0
        %1134 = vmatprep.subr.bf16.mxu0 0
        %1135 = vmatpush1.bf16.xpose.msra.mxu0 0
        %1136 = vmatprep.subr.bf16.mxu0 0
        %1137 = vmatpush1.bf16.xpose.msra.mxu0 0
        %1138 = vmatprep.subr.bf16.mxu0 0
        %1139 = vmatpush1.bf16.xpose.msra.mxu0 %v1122
        %1140 = vmatprep.subr.bf16.mxu0 0
        %1141 = vmatpush2.bf16.xpose.msra.mxu0 0
        %1142 = vmatprep.subr.bf16.mxu0 0
        %1143 = vmatpush2.bf16.xpose.msra.mxu0 0
        %1144 = vmatprep.subr.bf16.mxu0 0
        %1145 = vmatpush2.bf16.xpose.msra.mxu0 0
        %1146 = vmatprep.subr.bf16.mxu0 0
        %1147 = vmatpush2.bf16.xpose.msra.mxu0 0
        %1148 = vmatprep.subr.bf16.mxu0 0
        %1149 = vmatpush2.bf16.xpose.msra.mxu0 0
        %1150 = vmatprep.subr.bf16.mxu0 0
        %1151 = vmatpush2.bf16.xpose.msra.mxu0 0
        %1152 = vmatprep.subr.bf16.mxu0 0
        %1153 = vmatpush2.bf16.xpose.msra.mxu0 0
        %1154 = vmatprep.subr.bf16.mxu0 0
        %1155 = vmatpush2.bf16.xpose.msra.mxu0 0
        %1156 = vmatprep.mubr.bf16.mxu0 0
        %1157 = vmatmul.mubr.bf16.gmra.mxu0 %v1119
        %v1158 = vpop.f32.mrf.mxu0
        %v1159 = vadd.f32 0.0, %v1158
        %v1160 = vpop.f32.mrf.mxu0
        %v1161 = vpop.f32.mrf.mxu0
        %v1162 = vpop.f32.mrf.mxu0
        %1163 = vdwg.mxu0
        %vm1164 = vcmask 36864
        %v1165 = vsel %vm1164, %v1159, -inf
        %1166 = vmax.xlane.f32.xlu0 %v1165
        %v1167 = vpop.xlane.xlu0 %1166
        %v1168 = vsub.f32 %v1159, %v1167
        %v1169 = vmul.f32 %v1168, 1.442695
        %v1170 = vpow.pop %v1169
        %v1171 = vsel %vm1164, %v1170, 0.0
        %1172 = vadd.xlane.f32.xlu0 %v1171
        %v1173 = vpop.xlane.xlu0 %1172
        %v1174 = vrcp.pop %v1173
        %v1175 = vmul.f32 %v1170, %v1174
        %v1176 = vpack.c.bf16 %v1175, %v1175
        %1177 = vrot.lane.b32.xlu0 %v1113, 64
        %v1178 = vpop.permute.xlu0 %1177
        %vm1179 = vcmask 39936
        %v1181 = vsel %vm1179, %v1176, 0
        %vm1183 = vcmask 1041408
        %vm1184 = vcmask 1042432
        %v1185 = vsel %vm1183, 4294967295, 65535
        %v1186 = vsel %vm1184, %v1185, 0
        %v1188 = vand.u32 %v1178, %v1186
        %1190 = vmatprep.subr.bf16.mxu0 0
        %1191 = vmatpush1.bf16.msra.mxu0 0
        %1192 = vmatprep.subr.bf16.mxu0 0
        %1193 = vmatpush1.bf16.msra.mxu0 0
        %1194 = vmatprep.subr.bf16.mxu0 0
        %1195 = vmatpush1.bf16.msra.mxu0 0
        %1196 = vmatprep.subr.bf16.mxu0 0
        %1197 = vmatpush1.bf16.msra.mxu0 0
        %1198 = vmatprep.subr.bf16.mxu0 0
        %1199 = vmatpush1.bf16.msra.mxu0 0
        %1200 = vmatprep.subr.bf16.mxu0 0
        %1201 = vmatpush1.bf16.msra.mxu0 0
        %1202 = vmatprep.subr.bf16.mxu0 0
        %1203 = vmatpush1.bf16.msra.mxu0 0
        %1204 = vmatprep.subr.bf16.mxu0 0
        %1205 = vmatpush1.bf16.msra.mxu0 %v1188
        %1206 = vmatprep.subr.bf16.mxu0 0
        %1207 = vmatpush2.bf16.msra.mxu0 0
        %1208 = vmatprep.subr.bf16.mxu0 0
        %1209 = vmatpush2.bf16.msra.mxu0 0
        %1210 = vmatprep.subr.bf16.mxu0 0
        %1211 = vmatpush2.bf16.msra.mxu0 0
        %1212 = vmatprep.subr.bf16.mxu0 0
        %1213 = vmatpush2.bf16.msra.mxu0 0
        %1214 = vmatprep.subr.bf16.mxu0 0
        %1215 = vmatpush2.bf16.msra.mxu0 0
        %1216 = vmatprep.subr.bf16.mxu0 0
        %1217 = vmatpush2.bf16.msra.mxu0 0
        %1218 = vmatprep.subr.bf16.mxu0 0
        %1219 = vmatpush2.bf16.msra.mxu0 0
        %1220 = vmatprep.subr.bf16.mxu0 0
        %1221 = vmatpush2.bf16.msra.mxu0 0
        %1222 = vmatprep.mubr.bf16.mxu0 0
        %1223 = vmatmul.mubr.bf16.gmra.mxu0 %v1181
        %v1224 = vpop.f32.mrf.mxu0
        %v1225 = vadd.f32 0.0, %v1224
        %v1226 = vpop.f32.mrf.mxu0
        %v1227 = vpop.f32.mrf.mxu0
        %v1228 = vpop.f32.mrf.mxu0
        %1229 = vdwg.mxu0
        %1230 = vrot.lane.b32.xlu0 %v1113, 120
        %v1231 = vpop.permute.xlu0 %1230
        %1232 = vrot.lane.b32.xlu0 %v1113, 88
        %v1233 = vpop.permute.xlu0 %1232
        %v1235 = vsel %vm1117, %v1231, 0
        %v1238 = vsel %vm1117, %v1233, 0
        %1240 = vmatprep.subr.bf16.mxu0 0
        %1241 = vmatpush1.bf16.xpose.msra.mxu0 0
        %1242 = vmatprep.subr.bf16.mxu0 0
        %1243 = vmatpush1.bf16.xpose.msra.mxu0 0
        %1244 = vmatprep.subr.bf16.mxu0 0
        %1245 = vmatpush1.bf16.xpose.msra.mxu0 0
        %1246 = vmatprep.subr.bf16.mxu0 0
        %1247 = vmatpush1.bf16.xpose.msra.mxu0 0
        %1248 = vmatprep.subr.bf16.mxu0 0
        %1249 = vmatpush1.bf16.xpose.msra.mxu0 0
        %1250 = vmatprep.subr.bf16.mxu0 0
        %1251 = vmatpush1.bf16.xpose.msra.mxu0 0
        %1252 = vmatprep.subr.bf16.mxu0 0
        %1253 = vmatpush1.bf16.xpose.msra.mxu0 0
        %1254 = vmatprep.subr.bf16.mxu0 0
        %1255 = vmatpush1.bf16.xpose.msra.mxu0 %v1238
        %1256 = vmatprep.subr.bf16.mxu0 0
        %1257 = vmatpush2.bf16.xpose.msra.mxu0 0
        %1258 = vmatprep.subr.bf16.mxu0 0
        %1259 = vmatpush2.bf16.xpose.msra.mxu0 0
        %1260 = vmatprep.subr.bf16.mxu0 0
        %1261 = vmatpush2.bf16.xpose.msra.mxu0 0
        %1262 = vmatprep.subr.bf16.mxu0 0
        %1263 = vmatpush2.bf16.xpose.msra.mxu0 0
        %1264 = vmatprep.subr.bf16.mxu0 0
        %1265 = vmatpush2.bf16.xpose.msra.mxu0 0
        %1266 = vmatprep.subr.bf16.mxu0 0
        %1267 = vmatpush2.bf16.xpose.msra.mxu0 0
        %1268 = vmatprep.subr.bf16.mxu0 0
        %1269 = vmatpush2.bf16.xpose.msra.mxu0 0
        %1270 = vmatprep.subr.bf16.mxu0 0
        %1271 = vmatpush2.bf16.xpose.msra.mxu0 0
        %1272 = vmatprep.mubr.bf16.mxu0 0
        %1273 = vmatmul.mubr.bf16.gmra.mxu0 %v1235
        %v1274 = vpop.f32.mrf.mxu0
        %v1275 = vadd.f32 0.0, %v1274
        %v1276 = vpop.f32.mrf.mxu0
        %v1277 = vpop.f32.mrf.mxu0
        %v1278 = vpop.f32.mrf.mxu0
        %1279 = vdwg.mxu0
        %v1280 = vsel %vm1164, %v1275, -inf
        %1281 = vmax.xlane.f32.xlu0 %v1280
        %v1282 = vpop.xlane.xlu0 %1281
        %v1283 = vsub.f32 %v1275, %v1282
        %v1284 = vmul.f32 %v1283, 1.442695
        %v1285 = vpow.pop %v1284
        %v1286 = vsel %vm1164, %v1285, 0.0
        %1287 = vadd.xlane.f32.xlu0 %v1286
        %v1288 = vpop.xlane.xlu0 %1287
        %v1289 = vrcp.pop %v1288
        %v1290 = vmul.f32 %v1285, %v1289
        %v1291 = vpack.c.bf16 %v1290, %v1290
        %1292 = vrot.lane.b32.xlu0 %v1113, 56
        %v1293 = vpop.permute.xlu0 %1292
        %v1295 = vsel %vm1179, %v1291, 0
        %v1298 = vand.u32 %v1293, %v1186
        %1300 = vmatprep.subr.bf16.mxu0 0
        %1301 = vmatpush1.bf16.msra.mxu0 0
        %1302 = vmatprep.subr.bf16.mxu0 0
        %1303 = vmatpush1.bf16.msra.mxu0 0
        %1304 = vmatprep.subr.bf16.mxu0 0
        %1305 = vmatpush1.bf16.msra.mxu0 0
        %1306 = vmatprep.subr.bf16.mxu0 0
        %1307 = vmatpush1.bf16.msra.mxu0 0
        %1308 = vmatprep.subr.bf16.mxu0 0
        %1309 = vmatpush1.bf16.msra.mxu0 0
        %1310 = vmatprep.subr.bf16.mxu0 0
        %1311 = vmatpush1.bf16.msra.mxu0 0
        %1312 = vmatprep.subr.bf16.mxu0 0
        %1313 = vmatpush1.bf16.msra.mxu0 0
        %1314 = vmatprep.subr.bf16.mxu0 0
        %1315 = vmatpush1.bf16.msra.mxu0 %v1298
        %1316 = vmatprep.subr.bf16.mxu0 0
        %1317 = vmatpush2.bf16.msra.mxu0 0
        %1318 = vmatprep.subr.bf16.mxu0 0
        %1319 = vmatpush2.bf16.msra.mxu0 0
        %1320 = vmatprep.subr.bf16.mxu0 0
        %1321 = vmatpush2.bf16.msra.mxu0 0
        %1322 = vmatprep.subr.bf16.mxu0 0
        %1323 = vmatpush2.bf16.msra.mxu0 0
        %1324 = vmatprep.subr.bf16.mxu0 0
        %1325 = vmatpush2.bf16.msra.mxu0 0
        %1326 = vmatprep.subr.bf16.mxu0 0
        %1327 = vmatpush2.bf16.msra.mxu0 0
        %1328 = vmatprep.subr.bf16.mxu0 0
        %1329 = vmatpush2.bf16.msra.mxu0 0
        %1330 = vmatprep.subr.bf16.mxu0 0
        %1331 = vmatpush2.bf16.msra.mxu0 0
        %1332 = vmatprep.mubr.bf16.mxu0 0
        %1333 = vmatmul.mubr.bf16.gmra.mxu0 %v1295
        %v1334 = vpop.f32.mrf.mxu0
        %v1335 = vadd.f32 0.0, %v1334
        %v1336 = vpop.f32.mrf.mxu0
        %v1337 = vpop.f32.mrf.mxu0
        %v1338 = vpop.f32.mrf.mxu0
        %1339 = vdwg.mxu0
        %1340 = vrot.lane.b32.xlu0 %v1113, 112
        %v1341 = vpop.permute.xlu0 %1340
        %1342 = vrot.lane.b32.xlu0 %v1113, 80
        %v1343 = vpop.permute.xlu0 %1342
        %v1345 = vsel %vm1117, %v1341, 0
        %v1348 = vsel %vm1117, %v1343, 0
        %1350 = vmatprep.subr.bf16.mxu0 0
        %1351 = vmatpush1.bf16.xpose.msra.mxu0 0
        %1352 = vmatprep.subr.bf16.mxu0 0
        %1353 = vmatpush1.bf16.xpose.msra.mxu0 0
        %1354 = vmatprep.subr.bf16.mxu0 0
        %1355 = vmatpush1.bf16.xpose.msra.mxu0 0
        %1356 = vmatprep.subr.bf16.mxu0 0
        %1357 = vmatpush1.bf16.xpose.msra.mxu0 0
        %1358 = vmatprep.subr.bf16.mxu0 0
        %1359 = vmatpush1.bf16.xpose.msra.mxu0 0
        %1360 = vmatprep.subr.bf16.mxu0 0
        %1361 = vmatpush1.bf16.xpose.msra.mxu0 0
        %1362 = vmatprep.subr.bf16.mxu0 0
        %1363 = vmatpush1.bf16.xpose.msra.mxu0 0
        %1364 = vmatprep.subr.bf16.mxu0 0
        %1365 = vmatpush1.bf16.xpose.msra.mxu0 %v1348
        %1366 = vmatprep.subr.bf16.mxu0 0
        %1367 = vmatpush2.bf16.xpose.msra.mxu0 0
        %1368 = vmatprep.subr.bf16.mxu0 0
        %1369 = vmatpush2.bf16.xpose.msra.mxu0 0
        %1370 = vmatprep.subr.bf16.mxu0 0
        %1371 = vmatpush2.bf16.xpose.msra.mxu0 0
        %1372 = vmatprep.subr.bf16.mxu0 0
        %1373 = vmatpush2.bf16.xpose.msra.mxu0 0
        %1374 = vmatprep.subr.bf16.mxu0 0
        %1375 = vmatpush2.bf16.xpose.msra.mxu0 0
        %1376 = vmatprep.subr.bf16.mxu0 0
        %1377 = vmatpush2.bf16.xpose.msra.mxu0 0
        %1378 = vmatprep.subr.bf16.mxu0 0
        %1379 = vmatpush2.bf16.xpose.msra.mxu0 0
        %1380 = vmatprep.subr.bf16.mxu0 0
        %1381 = vmatpush2.bf16.xpose.msra.mxu0 0
        %1382 = vmatprep.mubr.bf16.mxu0 0
        %1383 = vmatmul.mubr.bf16.gmra.mxu0 %v1345
        %v1384 = vpop.f32.mrf.mxu0
        %v1385 = vadd.f32 0.0, %v1384
        %v1386 = vpop.f32.mrf.mxu0
        %v1387 = vpop.f32.mrf.mxu0
        %v1388 = vpop.f32.mrf.mxu0
        %1389 = vdwg.mxu0
        %v1390 = vsel %vm1164, %v1385, -inf
        %1391 = vmax.xlane.f32.xlu0 %v1390
        %v1392 = vpop.xlane.xlu0 %1391
        %v1393 = vsub.f32 %v1385, %v1392
        %v1394 = vmul.f32 %v1393, 1.442695
        %v1395 = vpow.pop %v1394
        %v1396 = vsel %vm1164, %v1395, 0.0
        %1397 = vadd.xlane.f32.xlu0 %v1396
        %v1398 = vpop.xlane.xlu0 %1397
        %v1399 = vrcp.pop %v1398
        %v1400 = vmul.f32 %v1395, %v1399
        %v1401 = vpack.c.bf16 %v1400, %v1400
        %1402 = vrot.lane.b32.xlu0 %v1113, 48
        %v1403 = vpop.permute.xlu0 %1402
        %v1405 = vsel %vm1179, %v1401, 0
        %v1408 = vand.u32 %v1403, %v1186
        %1410 = vmatprep.subr.bf16.mxu0 0
        %1411 = vmatpush1.bf16.msra.mxu0 0
        %1412 = vmatprep.subr.bf16.mxu0 0
        %1413 = vmatpush1.bf16.msra.mxu0 0
        %1414 = vmatprep.subr.bf16.mxu0 0
        %1415 = vmatpush1.bf16.msra.mxu0 0
        %1416 = vmatprep.subr.bf16.mxu0 0
        %1417 = vmatpush1.bf16.msra.mxu0 0
        %1418 = vmatprep.subr.bf16.mxu0 0
        %1419 = vmatpush1.bf16.msra.mxu0 0
        %1420 = vmatprep.subr.bf16.mxu0 0
        %1421 = vmatpush1.bf16.msra.mxu0 0
        %1422 = vmatprep.subr.bf16.mxu0 0
        %1423 = vmatpush1.bf16.msra.mxu0 0
        %1424 = vmatprep.subr.bf16.mxu0 0
        %1425 = vmatpush1.bf16.msra.mxu0 %v1408
        %1426 = vmatprep.subr.bf16.mxu0 0
        %1427 = vmatpush2.bf16.msra.mxu0 0
        %1428 = vmatprep.subr.bf16.mxu0 0
        %1429 = vmatpush2.bf16.msra.mxu0 0
        %1430 = vmatprep.subr.bf16.mxu0 0
        %1431 = vmatpush2.bf16.msra.mxu0 0
        %1432 = vmatprep.subr.bf16.mxu0 0
        %1433 = vmatpush2.bf16.msra.mxu0 0
        %1434 = vmatprep.subr.bf16.mxu0 0
        %1435 = vmatpush2.bf16.msra.mxu0 0
        %1436 = vmatprep.subr.bf16.mxu0 0
        %1437 = vmatpush2.bf16.msra.mxu0 0
        %1438 = vmatprep.subr.bf16.mxu0 0
        %1439 = vmatpush2.bf16.msra.mxu0 0
        %1440 = vmatprep.subr.bf16.mxu0 0
        %1441 = vmatpush2.bf16.msra.mxu0 0
        %1442 = vmatprep.mubr.bf16.mxu0 0
        %1443 = vmatmul.mubr.bf16.gmra.mxu0 %v1405
        %v1444 = vpop.f32.mrf.mxu0
        %v1445 = vadd.f32 0.0, %v1444
        %v1446 = vpop.f32.mrf.mxu0
        %v1447 = vpop.f32.mrf.mxu0
        %v1448 = vpop.f32.mrf.mxu0
        %1449 = vdwg.mxu0
        %1450 = vrot.lane.b32.xlu0 %v1113, 104
        %v1451 = vpop.permute.xlu0 %1450
        %1452 = vrot.lane.b32.xlu0 %v1113, 72
        %v1453 = vpop.permute.xlu0 %1452
        %v1455 = vsel %vm1117, %v1451, 0
        %v1458 = vsel %vm1117, %v1453, 0
        %1460 = vmatprep.subr.bf16.mxu0 0
        %1461 = vmatpush1.bf16.xpose.msra.mxu0 0
        %1462 = vmatprep.subr.bf16.mxu0 0
        %1463 = vmatpush1.bf16.xpose.msra.mxu0 0
        %1464 = vmatprep.subr.bf16.mxu0 0
        %1465 = vmatpush1.bf16.xpose.msra.mxu0 0
        %1466 = vmatprep.subr.bf16.mxu0 0
        %1467 = vmatpush1.bf16.xpose.msra.mxu0 0
        %1468 = vmatprep.subr.bf16.mxu0 0
        %1469 = vmatpush1.bf16.xpose.msra.mxu0 0
        %1470 = vmatprep.subr.bf16.mxu0 0
        %1471 = vmatpush1.bf16.xpose.msra.mxu0 0
        %1472 = vmatprep.subr.bf16.mxu0 0
        %1473 = vmatpush1.bf16.xpose.msra.mxu0 0
        %1474 = vmatprep.subr.bf16.mxu0 0
        %1475 = vmatpush1.bf16.xpose.msra.mxu0 %v1458
        %1476 = vmatprep.subr.bf16.mxu0 0
        %1477 = vmatpush2.bf16.xpose.msra.mxu0 0
        %1478 = vmatprep.subr.bf16.mxu0 0
        %1479 = vmatpush2.bf16.xpose.msra.mxu0 0
        %1480 = vmatprep.subr.bf16.mxu0 0
        %1481 = vmatpush2.bf16.xpose.msra.mxu0 0
        %1482 = vmatprep.subr.bf16.mxu0 0
        %1483 = vmatpush2.bf16.xpose.msra.mxu0 0
        %1484 = vmatprep.subr.bf16.mxu0 0
        %1485 = vmatpush2.bf16.xpose.msra.mxu0 0
        %1486 = vmatprep.subr.bf16.mxu0 0
        %1487 = vmatpush2.bf16.xpose.msra.mxu0 0
        %1488 = vmatprep.subr.bf16.mxu0 0
        %1489 = vmatpush2.bf16.xpose.msra.mxu0 0
        %1490 = vmatprep.subr.bf16.mxu0 0
        %1491 = vmatpush2.bf16.xpose.msra.mxu0 0
        %1492 = vmatprep.mubr.bf16.mxu0 0
        %1493 = vmatmul.mubr.bf16.gmra.mxu0 %v1455
        %v1494 = vpop.f32.mrf.mxu0
        %v1495 = vadd.f32 0.0, %v1494
        %v1496 = vpop.f32.mrf.mxu0
        %v1497 = vpop.f32.mrf.mxu0
        %v1498 = vpop.f32.mrf.mxu0
        %1499 = vdwg.mxu0
        %v1500 = vsel %vm1164, %v1495, -inf
        %1501 = vmax.xlane.f32.xlu0 %v1500
        %v1502 = vpop.xlane.xlu0 %1501
        %v1503 = vsub.f32 %v1495, %v1502
        %v1504 = vmul.f32 %v1503, 1.442695
        %v1505 = vpow.pop %v1504
        %v1506 = vsel %vm1164, %v1505, 0.0
        %1507 = vadd.xlane.f32.xlu0 %v1506
        %v1508 = vpop.xlane.xlu0 %1507
        %v1509 = vrcp.pop %v1508
        %v1510 = vmul.f32 %v1505, %v1509
        %v1511 = vpack.c.bf16 %v1510, %v1510
        %1512 = vrot.lane.b32.xlu0 %v1113, 40
        %v1513 = vpop.permute.xlu0 %1512
        %v1515 = vsel %vm1179, %v1511, 0
        %v1518 = vand.u32 %v1513, %v1186
        %1520 = vmatprep.subr.bf16.mxu0 0
        %1521 = vmatpush1.bf16.msra.mxu0 0
        %1522 = vmatprep.subr.bf16.mxu0 0
        %1523 = vmatpush1.bf16.msra.mxu0 0
        %1524 = vmatprep.subr.bf16.mxu0 0
        %1525 = vmatpush1.bf16.msra.mxu0 0
        %1526 = vmatprep.subr.bf16.mxu0 0
        %1527 = vmatpush1.bf16.msra.mxu0 0
        %1528 = vmatprep.subr.bf16.mxu0 0
        %1529 = vmatpush1.bf16.msra.mxu0 0
        %1530 = vmatprep.subr.bf16.mxu0 0
        %1531 = vmatpush1.bf16.msra.mxu0 0
        %1532 = vmatprep.subr.bf16.mxu0 0
        %1533 = vmatpush1.bf16.msra.mxu0 0
        %1534 = vmatprep.subr.bf16.mxu0 0
        %1535 = vmatpush1.bf16.msra.mxu0 %v1518
        %1536 = vmatprep.subr.bf16.mxu0 0
        %1537 = vmatpush2.bf16.msra.mxu0 0
        %1538 = vmatprep.subr.bf16.mxu0 0
        %1539 = vmatpush2.bf16.msra.mxu0 0
        %1540 = vmatprep.subr.bf16.mxu0 0
        %1541 = vmatpush2.bf16.msra.mxu0 0
        %1542 = vmatprep.subr.bf16.mxu0 0
        %1543 = vmatpush2.bf16.msra.mxu0 0
        %1544 = vmatprep.subr.bf16.mxu0 0
        %1545 = vmatpush2.bf16.msra.mxu0 0
        %1546 = vmatprep.subr.bf16.mxu0 0
        %1547 = vmatpush2.bf16.msra.mxu0 0
        %1548 = vmatprep.subr.bf16.mxu0 0
        %1549 = vmatpush2.bf16.msra.mxu0 0
        %1550 = vmatprep.subr.bf16.mxu0 0
        %1551 = vmatpush2.bf16.msra.mxu0 0
        %1552 = vmatprep.mubr.bf16.mxu0 0
        %1553 = vmatmul.mubr.bf16.gmra.mxu0 %v1515
        %v1554 = vpop.f32.mrf.mxu0
        %v1555 = vadd.f32 0.0, %v1554
        %v1556 = vpop.f32.mrf.mxu0
        %v1557 = vpop.f32.mrf.mxu0
        %v1558 = vpop.f32.mrf.mxu0
        %1559 = vdwg.mxu0
        %1561 = vrot.lane.b32.xlu0 %v1335, 8
        %v1562 = vpop.permute.xlu0 %1561
        %1565 = vrot.lane.b32.xlu0 %v1445, 16
        %v1566 = vpop.permute.xlu0 %1565
        %1569 = vrot.lane.b32.xlu0 %v1555, 24
        %v1570 = vpop.permute.xlu0 %1569
        %v1572 = vsel %vm1117, %v1225, %v1562
        %vm1573 = vcmask 130048
        %v1574 = vsel %vm1573, %v1572, %v1566
        %vm1575 = vcmask 195584
        %v1576 = vsel %vm1575, %v1574, %v1570
        %v1577 = vpack.c.bf16 %v1576, %v1576
        %v1578 = vld [vmem:[%s799] sm:$0xf]
        %v1579 = vld [vmem:[%s799 + $0x4] sm:$0xf]
        %v1580 = vld [vmem:[%s799 + $0x8] sm:$0xf]
        %v1581 = vld [vmem:[%s799 + $0xc] sm:$0xf]
        %v1586 = vunpack.c.l.b16 %v1578
        %v1587 = vunpack.c.l.b16 %v1579
        %v1588 = vunpack.c.l.b16 %v1580
        %v1589 = vunpack.c.l.b16 %v1581
        %v1590 = vpack.c.b16 %v1587, %v1586
        %v1591 = vpack.c.b16 %v1589, %v1588
        %v1595 = vsel %vm1069, %v1577, 0
        %1597 = vmatprep.subr.bf16.mxu0 0
        %1598 = vmatpush1.bf16.msra.mxu0 0
        %1599 = vmatprep.subr.bf16.mxu0 0
        %1600 = vmatpush1.bf16.msra.mxu0 0
        %1601 = vmatprep.subr.bf16.mxu0 0
        %1602 = vmatpush1.bf16.msra.mxu0 0
        %1603 = vmatprep.subr.bf16.mxu0 0
        %1604 = vmatpush1.bf16.msra.mxu0 0
        %1605 = vmatprep.subr.bf16.mxu0 0
        %1606 = vmatpush1.bf16.msra.mxu0 0
        %1607 = vmatprep.subr.bf16.mxu0 0
        %1608 = vmatpush1.bf16.msra.mxu0 0
        %1609 = vmatprep.subr.bf16.mxu0 0
        %1610 = vmatpush1.bf16.msra.mxu0 %v1591
        %1611 = vmatprep.subr.bf16.mxu0 0
        %1612 = vmatpush1.bf16.msra.mxu0 %v1590
        %1613 = vmatprep.subr.bf16.mxu0 0
        %1614 = vmatpush2.bf16.msra.mxu0 0
        %1615 = vmatprep.subr.bf16.mxu0 0
        %1616 = vmatpush2.bf16.msra.mxu0 0
        %1617 = vmatprep.subr.bf16.mxu0 0
        %1618 = vmatpush2.bf16.msra.mxu0 0
        %1619 = vmatprep.subr.bf16.mxu0 0
        %1620 = vmatpush2.bf16.msra.mxu0 0
        %1621 = vmatprep.subr.bf16.mxu0 0
        %1622 = vmatpush2.bf16.msra.mxu0 0
        %1623 = vmatprep.subr.bf16.mxu0 0
        %1624 = vmatpush2.bf16.msra.mxu0 0
        %1625 = vmatprep.subr.bf16.mxu0 0
        %1626 = vmatpush2.bf16.msra.mxu0 0
        %1627 = vmatprep.subr.bf16.mxu0 0
        %1628 = vmatpush2.bf16.msra.mxu0 0
        %1629 = vmatprep.mubr.bf16.mxu0 0
        %1630 = vmatmul.mubr.bf16.gmra.mxu0 %v1595
        %v1631 = vpop.f32.mrf.mxu0
        %v1632 = vadd.f32 0.0, %v1631
        %v1633 = vpop.f32.mrf.mxu0
        %v1634 = vpop.f32.mrf.mxu0
        %v1635 = vpop.f32.mrf.mxu0
        %1636 = vdwg.mxu0
        %v1637 = vadd.f32 %v1013, %v1632
        %v1638 = vld [vmem:[%s802] sm:$0x1]
        %v1640 = vlaneseq
        %v1641 = vshrl.u32 %v1640, 7
        %v1642 = vsub.s32 0, %v1641
        %v1643 = vrot.slane %v1638, %v1642
        %v1645 = vadd.f32 %v1637, %v1643
        %v1646 = vld [vmem:[%s811] sm:$0x1]
        %v1647 = vld [vmem:[%s814] sm:$0x1]
        %v1648 = vsel %vm1016, %v1645, 0.0
        %1649 = vadd.xlane.f32.xlu0 %v1648
        %v1650 = vpop.xlane.xlu0 %1649
        %v1651 = vmul.f32 %v1650, %v1020
        %v1652 = vsub.f32 %v1645, %v1651
        %v1653 = vmul.f32 %v1652, %v1652
        %v1654 = vsel %vm1016, %v1653, 0.0
        %1655 = vadd.xlane.f32.xlu0 %v1654
        %v1656 = vpop.xlane.xlu0 %1655
        %v1657 = vmul.f32 %v1656, %v1020
        %v1658 = vadd.f32 %v1657, 1e-05
        %v1659 = vrsqrt.pop %v1658
        %v1660 = vmul.f32 %v1652, %v1659
        %v1662 = vlaneseq
        %v1663 = vshrl.u32 %v1662, 7
        %v1664 = vsub.s32 0, %v1663
        %v1665 = vrot.slane %v1646, %v1664
        %v1667 = vmul.f32 %v1660, %v1665
        %v1669 = vlaneseq
        %v1670 = vshrl.u32 %v1669, 7
        %v1671 = vsub.s32 0, %v1670
        %v1672 = vrot.slane %v1647, %v1671
        %v1674 = vadd.f32 %v1667, %v1672
        %v1675 = vpack.c.bf16 %v1674, %v1674
        %v1676 = vld [vmem:[%s819] sm:$0xf]
        %v1677 = vld [vmem:[%s819 + $0x4] sm:$0xf]
        %v1678 = vld [vmem:[%s819 + $0x8] sm:$0xf]
        %v1679 = vld [vmem:[%s819 + $0xc] sm:$0xf]
        %v1680 = vld [vmem:[%s822] sm:$0x1]
        %v1682 = vlaneseq
        %v1683 = vshrl.u32 %v1682, 7
        %v1684 = vsub.s32 0, %v1683
        %v1685 = vrot.slane %v1680, %v1684
        %v1691 = vunpack.c.l.b16 %v1676
        %v1692 = vunpack.c.l.b16 %v1677
        %v1693 = vunpack.c.l.b16 %v1678
        %v1694 = vunpack.c.l.b16 %v1679
        %v1695 = vpack.c.b16 %v1692, %v1691
        %v1696 = vpack.c.b16 %v1694, %v1693
        %v1700 = vsel %vm1069, %v1675, 0
        %1702 = vmatprep.subr.bf16.mxu0 0
        %1703 = vmatpush1.bf16.msra.mxu0 0
        %1704 = vmatprep.subr.bf16.mxu0 0
        %1705 = vmatpush1.bf16.msra.mxu0 0
        %1706 = vmatprep.subr.bf16.mxu0 0
        %1707 = vmatpush1.bf16.msra.mxu0 0
        %1708 = vmatprep.subr.bf16.mxu0 0
        %1709 = vmatpush1.bf16.msra.mxu0 0
        %1710 = vmatprep.subr.bf16.mxu0 0
        %1711 = vmatpush1.bf16.msra.mxu0 0
        %1712 = vmatprep.subr.bf16.mxu0 0
        %1713 = vmatpush1.bf16.msra.mxu0 0
        %1714 = vmatprep.subr.bf16.mxu0 0
        %1715 = vmatpush1.bf16.msra.mxu0 %v1696
        %1716 = vmatprep.subr.bf16.mxu0 0
        %1717 = vmatpush1.bf16.msra.mxu0 %v1695
        %1718 = vmatprep.subr.bf16.mxu0 0
        %1719 = vmatpush2.bf16.msra.mxu0 0
        %1720 = vmatprep.subr.bf16.mxu0 0
        %1721 = vmatpush2.bf16.msra.mxu0 0
        %1722 = vmatprep.subr.bf16.mxu0 0
        %1723 = vmatpush2.bf16.msra.mxu0 0
        %1724 = vmatprep.subr.bf16.mxu0 0
        %1725 = vmatpush2.bf16.msra.mxu0 0
        %1726 = vmatprep.subr.bf16.mxu0 0
        %1727 = vmatpush2.bf16.msra.mxu0 0
        %1728 = vmatprep.subr.bf16.mxu0 0
        %1729 = vmatpush2.bf16.msra.mxu0 0
        %1730 = vmatprep.subr.bf16.mxu0 0
        %1731 = vmatpush2.bf16.msra.mxu0 0
        %1732 = vmatprep.subr.bf16.mxu0 0
        %1733 = vmatpush2.bf16.msra.mxu0 0
        %1734 = vmatprep.mubr.bf16.mxu0 0
        %1735 = vmatmul.mubr.bf16.gmra.mxu0 %v1700
        %v1736 = vpop.f32.mrf.mxu0
        %v1737 = vadd.f32 %v1685, %v1736
        %v1738 = vpop.f32.mrf.mxu0
        %v1739 = vpop.f32.mrf.mxu0
        %v1740 = vpop.f32.mrf.mxu0
        %1741 = vdwg.mxu0
        %v1742 = vmul.f32 %v1737, 1.702
        %v1743 = vxor.u32 %v1742, 2147483648
        %v1744 = vmul.f32 %v1743, 1.442695
        %v1745 = vpow.pop %v1744
        %v1746 = vadd.f32 %v1745, 1.0
        %v1747 = vrcp.pop %v1746
        %v1748 = vmul.f32 1.0, %v1747
        %v1749 = vmul.f32 %v1737, %v1748
        %v1750 = vpack.c.bf16 %v1749, %v1749
        %v1751 = vld [vmem:[%s827] sm:$0xf]
        %v1752 = vld [vmem:[%s827 + $0x4] sm:$0xf]
        %v1753 = vld [vmem:[%s827 + $0x8] sm:$0xf]
        %v1754 = vld [vmem:[%s827 + $0xc] sm:$0xf]
        %v1755 = vld [vmem:[%s827 + $0x10] sm:$0xf]
        %v1756 = vld [vmem:[%s827 + $0x14] sm:$0xf]
        %v1757 = vld [vmem:[%s827 + $0x18] sm:$0xf]
        %v1758 = vld [vmem:[%s827 + $0x1c] sm:$0xf]
        %v1759 = vld [vmem:[%s827 + $0x20] sm:$0xf]
        %v1760 = vld [vmem:[%s827 + $0x24] sm:$0xf]
        %v1761 = vld [vmem:[%s827 + $0x28] sm:$0xf]
        %v1762 = vld [vmem:[%s827 + $0x2c] sm:$0xf]
        %v1763 = vld [vmem:[%s827 + $0x30] sm:$0xf]
        %v1764 = vld [vmem:[%s827 + $0x34] sm:$0xf]
        %v1765 = vld [vmem:[%s827 + $0x38] sm:$0xf]
        %v1766 = vld [vmem:[%s827 + $0x3c] sm:$0xf]
        %v1783 = vunpack.c.l.b16 %v1751
        %v1784 = vunpack.c.l.b16 %v1752
        %v1785 = vunpack.c.l.b16 %v1753
        %v1786 = vunpack.c.l.b16 %v1754
        %v1787 = vunpack.c.l.b16 %v1755
        %v1788 = vunpack.c.l.b16 %v1756
        %v1789 = vunpack.c.l.b16 %v1757
        %v1790 = vunpack.c.l.b16 %v1758
        %v1791 = vunpack.c.l.b16 %v1759
        %v1792 = vunpack.c.l.b16 %v1760
        %v1793 = vunpack.c.l.b16 %v1761
        %v1794 = vunpack.c.l.b16 %v1762
        %v1795 = vunpack.c.l.b16 %v1763
        %v1796 = vunpack.c.l.b16 %v1764
        %v1797 = vunpack.c.l.b16 %v1765
        %v1798 = vunpack.c.l.b16 %v1766
        %v1799 = vpack.c.b16 %v1784, %v1783
        %v1800 = vpack.c.b16 %v1786, %v1785
        %v1801 = vpack.c.b16 %v1788, %v1787
        %v1802 = vpack.c.b16 %v1790, %v1789
        %v1803 = vpack.c.b16 %v1792, %v1791
        %v1804 = vpack.c.b16 %v1794, %v1793
        %v1805 = vpack.c.b16 %v1796, %v1795
        %v1806 = vpack.c.b16 %v1798, %v1797
        %1815 = vmatprep.subr.bf16.mxu0 0
        %1816 = vmatpush1.bf16.msra.mxu0 %v1806
        %1817 = vmatprep.subr.bf16.mxu0 0
        %1818 = vmatpush1.bf16.msra.mxu0 %v1805
        %1819 = vmatprep.subr.bf16.mxu0 0
        %1820 = vmatpush1.bf16.msra.mxu0 %v1804
        %1821 = vmatprep.subr.bf16.mxu0 0
        %1822 = vmatpush1.bf16.msra.mxu0 %v1803
        %1823 = vmatprep.subr.bf16.mxu0 0
        %1824 = vmatpush1.bf16.msra.mxu0 %v1802
        %1825 = vmatprep.subr.bf16.mxu0 0
        %1826 = vmatpush1.bf16.msra.mxu0 %v1801
        %1827 = vmatprep.subr.bf16.mxu0 0
        %1828 = vmatpush1.bf16.msra.mxu0 %v1800
        %1829 = vmatprep.subr.bf16.mxu0 0
        %1830 = vmatpush1.bf16.msra.mxu0 %v1799
        %1831 = vmatprep.subr.bf16.mxu0 0
        %1832 = vmatpush2.bf16.msra.mxu0 0
        %1833 = vmatprep.subr.bf16.mxu0 0
        %1834 = vmatpush2.bf16.msra.mxu0 0
        %1835 = vmatprep.subr.bf16.mxu0 0
        %1836 = vmatpush2.bf16.msra.mxu0 0
        %1837 = vmatprep.subr.bf16.mxu0 0
        %1838 = vmatpush2.bf16.msra.mxu0 0
        %1839 = vmatprep.subr.bf16.mxu0 0
        %1840 = vmatpush2.bf16.msra.mxu0 0
        %1841 = vmatprep.subr.bf16.mxu0 0
        %1842 = vmatpush2.bf16.msra.mxu0 0
        %1843 = vmatprep.subr.bf16.mxu0 0
        %1844 = vmatpush2.bf16.msra.mxu0 0
        %1845 = vmatprep.subr.bf16.mxu0 0
        %1846 = vmatpush2.bf16.msra.mxu0 0
        %1847 = vmatprep.mubr.bf16.mxu0 0
        %1848 = vmatmul.mubr.bf16.gmra.mxu0 %v1750
        %v1849 = vpop.f32.mrf.mxu0
        %v1850 = vadd.f32 0.0, %v1849
        %v1851 = vpop.f32.mrf.mxu0
        %v1852 = vpop.f32.mrf.mxu0
        %v1853 = vpop.f32.mrf.mxu0
        %1854 = vdwg.mxu0
        %v1855 = vadd.f32 %v1645, %v1850
        %v1856 = vld [vmem:[%s830] sm:$0x1]
        %v1858 = vlaneseq
        %v1859 = vshrl.u32 %v1858, 7
        %v1860 = vsub.s32 0, %v1859
        %v1861 = vrot.slane %v1856, %v1860
        %v1863 = vadd.f32 %v1855, %v1861
        %1864 = vst.msk [vmem:[#allocation2] sm:$0x1f] %vm1016, %v1863
        %p1865 = scmp.eq.s32.totalorder %s39, 1
        // Predicated region
        $region105: #{tpu_custom_call.1} parent=99 // pred_check
          %p1866 = pneg %p1865
        $region106: #{tpu_custom_call.1} parent=99 // pred_check_branch
          %1868 = sbr.rel (%p1866) target = $region108
        $region107: #{tpu_custom_call.1} parent=99 // pred_region
          %v1869 = vld [vmem:[%s17] sm:$0x1]
          %v1870 = vld [vmem:[%s18] sm:$0x1]
          %vm1871 = vcmask 253952
          %v1872 = vsel %vm1871, %v1863, 0.0
          %1873 = vadd.xlane.f32.xlu0 %v1872
          %v1874 = vpop.xlane.xlu0 %1873
          %v1875 = vmul.f32 %v1874, %v1020
          %v1876 = vsub.f32 %v1863, %v1875
          %v1877 = vmul.f32 %v1876, %v1876
          %v1878 = vsel %vm1871, %v1877, 0.0
          %1879 = vadd.xlane.f32.xlu0 %v1878
          %v1880 = vpop.xlane.xlu0 %1879
          %v1881 = vmul.f32 %v1880, %v1020
          %v1882 = vadd.f32 %v1881, 1e-05
          %v1883 = vrsqrt.pop %v1882
          %v1884 = vmul.f32 %v1876, %v1883
          %v1885 = vmul.f32 %v1884, %v1869
          %v1886 = vadd.f32 %v1885, %v1870
          %v1887 = vpack.c.bf16 %v1886, %v1886
          %v1888 = vld [vmem:[%s19] sm:$0xf]
          %v1889 = vld [vmem:[%s19 + $0x4] sm:$0xf]
          %v1890 = vld [vmem:[%s19 + $0x8] sm:$0xf]
          %v1891 = vld [vmem:[%s19 + $0xc] sm:$0xf]
          %v1896 = vunpack.c.l.b16 %v1888
          %v1897 = vunpack.c.l.b16 %v1889
          %v1898 = vunpack.c.l.b16 %v1890
          %v1899 = vunpack.c.l.b16 %v1891
          %v1900 = vpack.c.b16 %v1897, %v1896
          %v1901 = vpack.c.b16 %v1899, %v1898
          %v1905 = vsel %vm1069, %v1887, 0
          %1907 = vmatprep.subr.bf16.mxu0 0
          %1908 = vmatpush1.bf16.msra.mxu0 0
          %1909 = vmatprep.subr.bf16.mxu0 0
          %1910 = vmatpush1.bf16.msra.mxu0 0
          %1911 = vmatprep.subr.bf16.mxu0 0
          %1912 = vmatpush1.bf16.msra.mxu0 0
          %1913 = vmatprep.subr.bf16.mxu0 0
          %1914 = vmatpush1.bf16.msra.mxu0 0
          %1915 = vmatprep.subr.bf16.mxu0 0
          %1916 = vmatpush1.bf16.msra.mxu0 0
          %1917 = vmatprep.subr.bf16.mxu0 0
          %1918 = vmatpush1.bf16.msra.mxu0 0
          %1919 = vmatprep.subr.bf16.mxu0 0
          %1920 = vmatpush1.bf16.msra.mxu0 %v1901
          %1921 = vmatprep.subr.bf16.mxu0 0
          %1922 = vmatpush1.bf16.msra.mxu0 %v1900
          %1923 = vmatprep.subr.bf16.mxu0 0
          %1924 = vmatpush2.bf16.msra.mxu0 0
          %1925 = vmatprep.subr.bf16.mxu0 0
          %1926 = vmatpush2.bf16.msra.mxu0 0
          %1927 = vmatprep.subr.bf16.mxu0 0
          %1928 = vmatpush2.bf16.msra.mxu0 0
          %1929 = vmatprep.subr.bf16.mxu0 0
          %1930 = vmatpush2.bf16.msra.mxu0 0
          %1931 = vmatprep.subr.bf16.mxu0 0
          %1932 = vmatpush2.bf16.msra.mxu0 0
          %1933 = vmatprep.subr.bf16.mxu0 0
          %1934 = vmatpush2.bf16.msra.mxu0 0
          %1935 = vmatprep.subr.bf16.mxu0 0
          %1936 = vmatpush2.bf16.msra.mxu0 0
          %1937 = vmatprep.subr.bf16.mxu0 0
          %1938 = vmatpush2.bf16.msra.mxu0 0
          %1939 = vmatprep.mubr.bf16.mxu0 0
          %1940 = vmatmul.mubr.bf16.gmra.mxu0 %v1905
          %v1941 = vpop.f32.mrf.mxu0
          %v1942 = vadd.f32 0.0, %v1941
          %v1943 = vpop.f32.mrf.mxu0
          %v1944 = vpop.f32.mrf.mxu0
          %v1945 = vpop.f32.mrf.mxu0
          %1946 = vdwg.mxu0
          %vm1947 = vcmask 122880
          %1948 = vst.msk [vmem:[%s781] sm:$0x1] %vm1947, %v1942
        $region108: #{tpu_custom_call.1} parent=99 // pred_fallthru
          _
        %s1949 = sand.u32 %s539, 1
        %s1950 = scalar_lea.sflag [#allocation4], %s1949
        %s1951 = sand.u32 %s539, 1
        %s1952 = scalar_lea.vmem [#allocation3], %s1951
        // Predicated region
        $region109: #{tpu_custom_call.1} parent=99 // pred_check
          %p1953 = pneg %p549
        $region110: #{tpu_custom_call.1} parent=99 // pred_check_branch
          %1955 = sbr.rel (%p1953) target = $region112
        $region111: #{tpu_custom_call.1} parent=99 // pred_region
          %s1957 = ssub.s32 16, 16
          %1958 = vsyncadd %s1950, %s1957
          %s1959 = smul.addr %s38, 16
          %s1960 = scalar_lea.hbm %s20, %s1959
          %s1962 = sshll.u32 %s1952, 4
          %s1963 = int_to_ptr.vmem [resolvable:$true] %s1962
          %1965 = dma.vmem_to_hbm [thread:$0]  %s1963, 16, %s1960, %s1950
        $region112: #{tpu_custom_call.1} parent=99 // pred_fallthru
          _
      $region100: #{tpu_custom_call.1} parent=5 // pred_fallthru
        _
      %p1966 = scmp.le.s32.totalorder 2, %s29
      // Predicated region
      $region113: #{tpu_custom_call.1} parent=5 // pred_check
        %p1967 = pneg %p1966
      $region114: #{tpu_custom_call.1} parent=5 // pred_check_branch
        %1969 = sbr.rel (%p1967) target = $region116
      $region115: #{tpu_custom_call.1} parent=5 // pred_region
        %s1970 = ssub.s32 %s29, 2
        // Predicated region
        $region117: #{tpu_custom_call.1} parent=115 // pred_check
          %p1971 = pneg %p555
        $region118: #{tpu_custom_call.1} parent=115 // pred_check_branch
          %1973 = sbr.rel (%p1971) target = $region120
        $region119: #{tpu_custom_call.1} parent=115 // pred_region
          %s1974 = sand.u32 %s540, 1
          %s1975 = scalar_lea.sflag [#allocation4], %s1974
          %s1976 = sand.u32 %s540, 1
          %s1977 = scalar_lea.vmem [#allocation3], %s1976
          %1978 = dma.done %s1975, 16
        $region120: #{tpu_custom_call.1} parent=115 // pred_fallthru
          _
      $region116: #{tpu_custom_call.1} parent=5 // pred_fallthru
        _
    $region6: #{tpu_custom_call.1} parent=1 // loop_footer
      %s33 = sadd.s32 1, %s29
    $region7: #{tpu_custom_call.1} parent=1 // loop_footer_branch
      %28 = sbr.rel target = $region3
    $region8: #{tpu_custom_call.1} parent=1 // loop_exit
      _
    %1979 = vsyncpa [#allocation4], 1
    %s1980 = scalar_lea.sflag [#allocation4], 1
    %1981 = vsyncpa %s1980, 1

</llo_original>
